<compile_context>
chip_gen: v7x
topology: tpu7x:2x2x1
jax: 0.10.0
libtpu: 0.0.40
codegen_flags: <defaults>
</compile_context>

<pallas_src>
import jax
import jax.numpy as jnp
from jax.experimental import pallas as pl
from jax.experimental.pallas import tpu as pltpu


BETA = 5.0
ALPHA = 0.01
# TODO(synk): CappedSymmetricLeakyReLU(auto_scale=True, beta=5) source is not provided;
# assumed odd, saturating leaky activation  f(x) = clip(x,-beta,beta) + alpha*(x - clip(x,-beta,beta)).


def _capped_sym_leaky(x):
    c = jnp.clip(x, -BETA, BETA)
    return c + ALPHA * (x - c)


def _round8(c):
    return -(-c // 8) * 8


# ---------------------------------------------------------------------------
# Fused kernel: [conv + bias + act] * n_conv -> per-image global max pool
#               -> column-major dense chain.
# Activations live as (C, NB*H*W) f32 (channels on sublanes, batched spatial on lanes).
# ---------------------------------------------------------------------------
def _build_fused_kernel(H, W, K, NB, cin_pads, n_dense):
    R = H * W
    L = NB * R
    n_conv = len(cin_pads)
    assert K % 2 == 1, "odd conv kernel with 'same' padding assumed"
    half = K // 2

    def kernel(*refs):
        masks_ref = refs[0]                      # (K*K, L) precomputed boundary masks
        x_ref = refs[1]                          # (Cin_pad, L)
        idx = 2
        conv_refs = refs[idx:idx + 2 * n_conv]
        idx += 2 * n_conv
        dense_refs = refs[idx:idx + 2 * n_dense]
        idx += 2 * n_dense
        o_ref = refs[idx]                        # (1, n_classes, NB)
        taps_ref = refs[idx + 1]                 # VMEM scratch (K*K*max_cin_pad, L)
        pool_ref = refs[idx + 2]                 # VMEM scratch (C_last_pad, NB)

        # ---- ABBA conv layers: in-VMEM im2col (roll + precomputed mask) + ONE matmul ----
        a = x_ref[...]                                           # (cin_pads[0], L)
        for li in range(n_conv):
            cin_p = cin_pads[li]
            w_ref, b_ref = conv_refs[2 * li], conv_refs[2 * li + 1]
            t = 0
            for kh in range(K):
                for kw in range(K):
                    dh, dw = kh - half, kw - half
                    s = dh * W + dw
                    # out[p] = a[(p + s) mod L]; wrapped / cross-image taps are zeroed
                    # by the precomputed boundary mask (built from pos % R) for this tap.
                    v = a if s == 0 else pltpu.roll(a, shift=(-s) % L, axis=1)
                    if not (dh == 0 and dw == 0):
                        v = v * masks_ref[pl.ds(t, 1), :]
                    taps_ref[pl.ds(t * cin_p, cin_p), :] = v
                    t += 1
            kkc = K * K * cin_p
            y = jnp.dot(w_ref[...], taps_ref[pl.ds(0, kkc), :],
                        preferred_element_type=jnp.float32)
            a = _capped_sym_leaky(y + b_ref[...])                # (cout_p, L)

        # ---- per-image global max pool over the R spatial lanes -> column-major (C, NB) ----
        for n in range(NB):
            seg = a[:, n * R:(n + 1) * R]                        # lane-aligned static slice
            pool_ref[:, pl.ds(n, 1)] = jnp.max(seg, axis=1, keepdims=True)
        z = pool_ref[...]                                        # (C_last_pad, NB)

        # ---- ABBA dense chain, column-major: (Dout, Din) @ (Din, NB) ----
        for li in range(n_dense):
            w_ref, b_ref = dense_refs[2 * li], dense_refs[2 * li + 1]
            z = jnp.dot(w_ref[...], z, preferred_element_type=jnp.float32) + b_ref[...]
            if li < n_dense - 1:
                z = _capped_sym_leaky(z)

        o_ref[0] = z.astype(o_ref.dtype)                         # (n_classes, NB)

    return kernel


def _build_masks(H, W, K, L):
    """(K*K, L) f32 'same'-padding boundary masks, tap order (kh, kw).  Positions are
    taken modulo R = H*W so NB images batched on the lane axis share the same masks,
    and roll wrap-around across image/block boundaries is zeroed."""
    R = H * W
    half = K // 2
    pos = jnp.arange(L, dtype=jnp.int32) % R
    row, col = pos // W, pos % W
    rows = []
    for kh in range(K):
        for kw in range(K):
            dh, dw = kh - half, kw - half
            ok = ((row + dh >= 0) & (row + dh < H) &
                  (col + dw >= 0) & (col + dw < W))
            rows.append(ok.astype(jnp.float32))
    return jnp.stack(rows, axis=0)


def _pick_nb(N, nb_max=8):
    # Batch NB images per grid step; keep >= 2 grid steps when the batch allows it so
    # dimension_semantics=("parallel",) can split the grid across v7x's 2 TensorCores.
    if N >= 2 * nb_max:
        return nb_max
    return max(1, N // 2)


# ---------------------------------------------------------------------------
# Wrapper: fold params once (A - B, channel padding, tap-major layout), precompute
# masks, lay the batch out on the lane axis, and launch the fused kernel.
# ---------------------------------------------------------------------------
def conv_dense_abba_forward(x_nchw, params, nb_max=8):
    """x_nchw: (N, C, H, W) f32.  Conv A/B: (out, in, K, K) torch layout; dense A/B:
    (out, in) torch Linear layout; biases: (out,)."""
    N, Cin, H, W = x_nchw.shape
    R = H * W
    K = params["conv"][0][0].shape[-1]
    NB = _pick_nb(N, nb_max)
    G = -(-N // NB)                   # grid steps
    N_pad = G * NB
    L = NB * R

    # --- fold parameters once (simplified ABBA weight = A - B, channel pad, tap-major) ---
    conv_ops, cin_pads = [], []
    prev_cp = _round8(Cin)
    for (A, B, b) in params["conv"]:
        cout, cin, k, _ = A.shape
        assert k == K
        cin_p, cout_p = prev_cp, _round8(cout)
        cin_pads.append(cin_p)
        w = jnp.zeros((cout_p, cin_p, K, K), A.dtype).at[:cout, :cin].set(A - B)
        # column order (kh, kw, ci) matches the taps buffer row order in the kernel
        w = jnp.transpose(w, (0, 2, 3, 1)).reshape(cout_p, K * K * cin_p)
        bias = jnp.zeros((cout_p, 1), b.dtype).at[:cout, 0].set(b)
        conv_ops += [w, bias]
        prev_cp = cout_p

    dense_ops = []
    din_p = prev_cp
    for (A, B, b) in params["dense"]:
        dout, din = A.shape
        # column-major dense chain: z_out = W @ z_in with W of shape (Dout, Din_pad)
        w = jnp.zeros((dout, din_p), A.dtype).at[:, :din].set(A - B)
        dense_ops += [w, b.reshape(dout, 1)]
        din_p = dout
    n_classes = params["dense"][-1][0].shape[0]

    # --- lane-dense, batch-on-lanes input: (Cin_pad, N_pad*R); image n at lanes [n*R,(n+1)*R)
    cin_p0 = _round8(Cin)
    x = x_nchw.reshape(N, Cin, R)
    x = jnp.pad(x, ((0, N_pad - N), (0, cin_p0 - Cin), (0, 0)))
    x = jnp.transpose(x, (1, 0, 2)).reshape(cin_p0, N_pad * R)

    masks = _build_masks(H, W, K, L)                  # hoisted grid-invariant masks
    kernel = _build_fused_kernel(H, W, K, NB, cin_pads, len(params["dense"]))

    def _const_spec(arr):
        nd = arr.ndim
        return pl.BlockSpec(arr.shape, lambda g, _nd=nd: (0,) * _nd)   # fetched once

    ops = conv_ops + dense_ops
    max_taps_rows = K * K * max(cin_pads)
    c_last_pad = prev_cp

    out = pl.pallas_call(
        kernel,
        out_shape=jax.ShapeDtypeStruct((G, n_classes, NB), jnp.float32),
        grid=(G,),
        in_specs=[_const_spec(masks),
                  pl.BlockSpec((cin_p0, L), lambda g: (0, g))]
                 + [_const_spec(o) for o in ops],
        out_specs=pl.BlockSpec((1, n_classes, NB), lambda g: (g, 0, 0)),
        scratch_shapes=[pltpu.VMEM((max_taps_rows, L), jnp.float32),
                        pltpu.VMEM((c_last_pad, NB), jnp.float32)],
        compiler_params=pltpu.CompilerParams(dimension_semantics=("parallel",)),
    )(masks, x, *ops)

    # (G, n_classes, NB) -> (N, n_classes)
    return out.transpose(0, 2, 1).reshape(N_pad, n_classes)[:N]


# ---------------------------------------------------------------------------
# Synthetic parameters (torch layouts) and a pure-JAX reference for validation.
# ---------------------------------------------------------------------------
def init_params(key, in_ch, inner_ch, k, depths_dense, n_classes):
    params = {"conv": [], "dense": []}
    prev = in_ch
    for c in inner_ch:
        key, ka, kb, kbias = jax.random.split(key, 4)
        A = jnp.abs(jax.random.normal(ka, (c, prev, k, k), jnp.float32)) * 0.2
        B = jnp.abs(jax.random.normal(kb, (c, prev, k, k), jnp.float32)) * 0.2
        b = jax.random.normal(kbias, (c,), jnp.float32) * 0.05
        params["conv"].append((A, B, b))
        prev = c
    prev = inner_ch[-1]                         # middle_dim (global_pool=True)
    for d in list(depths_dense) + [n_classes]:  # add_last_dense=True
        key, ka, kb, kbias = jax.random.split(key, 4)
        A = jnp.abs(jax.random.normal(ka, (d, prev), jnp.float32)) * 0.2
        B = jnp.abs(jax.random.normal(kb, (d, prev), jnp.float32)) * 0.2
        b = jax.random.normal(kbias, (d,), jnp.float32) * 0.05
        params["dense"].append((A, B, b))
        prev = d
    return params


def reference_forward(x_nchw, params):
    """Pure-JAX reference (same ABBA-simplified assumptions) for validation."""
    h = x_nchw
    for (A, B, b) in params["conv"]:
        h = jax.lax.conv_general_dilated(
            h, A - B, window_strides=(1, 1), padding=((1, 1), (1, 1)),
            dimension_numbers=("NCHW", "OIHW", "NCHW"),
            precision=jax.lax.Precision.HIGHEST)
        h = _capped_sym_leaky(h + b[None, :, None, None])
    h = jnp.max(h, axis=(2, 3))                 # Reduce('b c h w -> b c 1 1','max') + squeeze
    n = len(params["dense"])
    for i, (A, B, b) in enumerate(params["dense"]):
        h = jnp.dot(h, (A - B).T, precision=jax.lax.Precision.HIGHEST) + b
        if i < n - 1:
            h = _capped_sym_leaky(h)
    return h


if __name__ == "__main__":
    key = jax.random.PRNGKey(0)
    kx, kp = jax.random.split(key)

    N, C, H, W = 2, 4, 16, 16                   # PyTorch-style NCHW input
    inner_ch = [8, 16]
    depths_dense = [32]
    n_classes = 10

    x = jax.random.normal(kx, (N, C, H, W), jnp.float32)
    params = init_params(kp, in_ch=C, inner_ch=inner_ch, k=3,
                         depths_dense=depths_dense, n_classes=n_classes)

    fwd = jax.jit(conv_dense_abba_forward)
    out = jax.block_until_ready(fwd(x, params))

    ref = reference_forward(x, params)
    assert out.shape == (N, n_classes), out.shape
    err = float(jnp.max(jnp.abs(out - ref)))
    assert jnp.allclose(out, ref, atol=2e-4, rtol=2e-4), err

    print("KERNEL_OK")
</pallas_src>

<mosaic_0001>
module attributes {stable_mosaic.version = 11 : i64} {
  func.func @kernel(%arg0: i32, %arg1: memref<9x256xf32, #tpu.memory_space<vmem>>, %arg2: memref<8x256xf32, #tpu.memory_space<vmem>>, %arg3: memref<8x72xf32, #tpu.memory_space<vmem>>, %arg4: memref<8x1xf32, #tpu.memory_space<vmem>>, %arg5: memref<16x72xf32, #tpu.memory_space<vmem>>, %arg6: memref<16x1xf32, #tpu.memory_space<vmem>>, %arg7: memref<32x16xf32, #tpu.memory_space<vmem>>, %arg8: memref<32x1xf32, #tpu.memory_space<vmem>>, %arg9: memref<10x32xf32, #tpu.memory_space<vmem>>, %arg10: memref<10x1xf32, #tpu.memory_space<vmem>>, %arg11: memref<1x10x1xf32, #tpu.memory_space<vmem>>, %arg12: memref<72x256xf32, #tpu.memory_space<vmem>>, %arg13: memref<16x1xf32, #tpu.memory_space<vmem>>) attributes {dimension_semantics = [#tpu.dimension_semantics<parallel>], iteration_bounds = array<i64: 2>, scalar_prefetch = 0 : i64, scratch_operands = 2 : i64, tpu.core_type = #tpu.core_type<tc>, window_params = [{pipeline_mode = #tpu.pipeline_mode<synchronous>, transform_indices = @transform_0, window_bounds = array<i64: 9, 256>}, {transform_indices = @transform_1, window_bounds = array<i64: 8, 256>}, {pipeline_mode = #tpu.pipeline_mode<synchronous>, transform_indices = @transform_2, window_bounds = array<i64: 8, 72>}, {pipeline_mode = #tpu.pipeline_mode<synchronous>, transform_indices = @transform_3, window_bounds = array<i64: 8, 1>}, {pipeline_mode = #tpu.pipeline_mode<synchronous>, transform_indices = @transform_4, window_bounds = array<i64: 16, 72>}, {pipeline_mode = #tpu.pipeline_mode<synchronous>, transform_indices = @transform_5, window_bounds = array<i64: 16, 1>}, {pipeline_mode = #tpu.pipeline_mode<synchronous>, transform_indices = @transform_6, window_bounds = array<i64: 32, 16>}, {pipeline_mode = #tpu.pipeline_mode<synchronous>, transform_indices = @transform_7, window_bounds = array<i64: 32, 1>}, {pipeline_mode = #tpu.pipeline_mode<synchronous>, transform_indices = @transform_8, window_bounds = array<i64: 10, 32>}, {pipeline_mode = #tpu.pipeline_mode<synchronous>, transform_indices = @transform_9, window_bounds = array<i64: 10, 1>}, {transform_indices = @transform_10, window_bounds = array<i64: 1, 10, 1>}]} {
    %c0 = arith.constant 0 : index
    %c0_0 = arith.constant 0 : index
    %0 = vector.load %arg2[%c0, %c0_0] : memref<8x256xf32, #tpu.memory_space<vmem>>, vector<8x256xf32>
    %c17_i32 = arith.constant 17 : i32
    %1 = tpu.dynamic_rotate %0 by %c17_i32 dim 1 : vector<8x256xf32>, i32 -> vector<8x256xf32>
    %c0_1 = arith.constant 0 : index
    %c0_2 = arith.constant 0 : index
    %2 = vector.load %arg1[%c0_1, %c0_2] : memref<9x256xf32, #tpu.memory_space<vmem>>, vector<1x256xf32>
    %3 = vector.broadcast %2 : vector<1x256xf32> to vector<8x256xf32>
    %4 = arith.mulf %1, %3 : vector<8x256xf32>
    %c0_3 = arith.constant 0 : index
    %c0_4 = arith.constant 0 : index
    %5 = vector.load %arg12[%c0_3, %c0_4] : memref<72x256xf32, #tpu.memory_space<vmem>>, vector<8x256xf32>
    tpu.vector_store %arg12[%c0_3, %c0_4], %4 {strides = array<i32>} : memref<72x256xf32, #tpu.memory_space<vmem>>, vector<8x256xf32>,
    %c16_i32 = arith.constant 16 : i32
    %6 = tpu.dynamic_rotate %0 by %c16_i32 dim 1 : vector<8x256xf32>, i32 -> vector<8x256xf32>
    %c1 = arith.constant 1 : index
    %c0_5 = arith.constant 0 : index
    %7 = vector.load %arg1[%c1, %c0_5] : memref<9x256xf32, #tpu.memory_space<vmem>>, vector<1x256xf32>
    %8 = vector.broadcast %7 : vector<1x256xf32> to vector<8x256xf32>
    %9 = arith.mulf %6, %8 : vector<8x256xf32>
    %c8 = arith.constant 8 : index
    %c0_6 = arith.constant 0 : index
    %10 = vector.load %arg12[%c8, %c0_6] : memref<72x256xf32, #tpu.memory_space<vmem>>, vector<8x256xf32>
    tpu.vector_store %arg12[%c8, %c0_6], %9 {strides = array<i32>} : memref<72x256xf32, #tpu.memory_space<vmem>>, vector<8x256xf32>,
    %c15_i32 = arith.constant 15 : i32
    %11 = tpu.dynamic_rotate %0 by %c15_i32 dim 1 : vector<8x256xf32>, i32 -> vector<8x256xf32>
    %c2 = arith.constant 2 : index
    %c0_7 = arith.constant 0 : index
    %12 = vector.load %arg1[%c2, %c0_7] : memref<9x256xf32, #tpu.memory_space<vmem>>, vector<1x256xf32>
    %13 = vector.broadcast %12 : vector<1x256xf32> to vector<8x256xf32>
    %14 = arith.mulf %11, %13 : vector<8x256xf32>
    %c16 = arith.constant 16 : index
    %c0_8 = arith.constant 0 : index
    %15 = vector.load %arg12[%c16, %c0_8] : memref<72x256xf32, #tpu.memory_space<vmem>>, vector<8x256xf32>
    tpu.vector_store %arg12[%c16, %c0_8], %14 {strides = array<i32>} : memref<72x256xf32, #tpu.memory_space<vmem>>, vector<8x256xf32>,
    %c1_i32 = arith.constant 1 : i32
    %16 = tpu.dynamic_rotate %0 by %c1_i32 dim 1 : vector<8x256xf32>, i32 -> vector<8x256xf32>
    %c3 = arith.constant 3 : index
    %c0_9 = arith.constant 0 : index
    %17 = vector.load %arg1[%c3, %c0_9] : memref<9x256xf32, #tpu.memory_space<vmem>>, vector<1x256xf32>
    %18 = vector.broadcast %17 : vector<1x256xf32> to vector<8x256xf32>
    %19 = arith.mulf %16, %18 : vector<8x256xf32>
    %c24 = arith.constant 24 : index
    %c0_10 = arith.constant 0 : index
    %20 = vector.load %arg12[%c24, %c0_10] : memref<72x256xf32, #tpu.memory_space<vmem>>, vector<8x256xf32>
    tpu.vector_store %arg12[%c24, %c0_10], %19 {strides = array<i32>} : memref<72x256xf32, #tpu.memory_space<vmem>>, vector<8x256xf32>,
    %c32 = arith.constant 32 : index
    %c0_11 = arith.constant 0 : index
    %21 = vector.load %arg12[%c32, %c0_11] : memref<72x256xf32, #tpu.memory_space<vmem>>, vector<8x256xf32>
    tpu.vector_store %arg12[%c32, %c0_11], %0 {strides = array<i32>} : memref<72x256xf32, #tpu.memory_space<vmem>>, vector<8x256xf32>,
    %c255_i32 = arith.constant 255 : i32
    %22 = tpu.dynamic_rotate %0 by %c255_i32 dim 1 : vector<8x256xf32>, i32 -> vector<8x256xf32>
    %c5 = arith.constant 5 : index
    %c0_12 = arith.constant 0 : index
    %23 = vector.load %arg1[%c5, %c0_12] : memref<9x256xf32, #tpu.memory_space<vmem>>, vector<1x256xf32>
    %24 = vector.broadcast %23 : vector<1x256xf32> to vector<8x256xf32>
    %25 = arith.mulf %22, %24 : vector<8x256xf32>
    %c40 = arith.constant 40 : index
    %c0_13 = arith.constant 0 : index
    %26 = vector.load %arg12[%c40, %c0_13] : memref<72x256xf32, #tpu.memory_space<vmem>>, vector<8x256xf32>
    tpu.vector_store %arg12[%c40, %c0_13], %25 {strides = array<i32>} : memref<72x256xf32, #tpu.memory_space<vmem>>, vector<8x256xf32>,
    %c241_i32 = arith.constant 241 : i32
    %27 = tpu.dynamic_rotate %0 by %c241_i32 dim 1 : vector<8x256xf32>, i32 -> vector<8x256xf32>
    %c6 = arith.constant 6 : index
    %c0_14 = arith.constant 0 : index
    %28 = vector.load %arg1[%c6, %c0_14] : memref<9x256xf32, #tpu.memory_space<vmem>>, vector<1x256xf32>
    %29 = vector.broadcast %28 : vector<1x256xf32> to vector<8x256xf32>
    %30 = arith.mulf %27, %29 : vector<8x256xf32>
    %c48 = arith.constant 48 : index
    %c0_15 = arith.constant 0 : index
    %31 = vector.load %arg12[%c48, %c0_15] : memref<72x256xf32, #tpu.memory_space<vmem>>, vector<8x256xf32>
    tpu.vector_store %arg12[%c48, %c0_15], %30 {strides = array<i32>} : memref<72x256xf32, #tpu.memory_space<vmem>>, vector<8x256xf32>,
    %c240_i32 = arith.constant 240 : i32
    %32 = tpu.dynamic_rotate %0 by %c240_i32 dim 1 : vector<8x256xf32>, i32 -> vector<8x256xf32>
    %c7 = arith.constant 7 : index
    %c0_16 = arith.constant 0 : index
    %33 = vector.load %arg1[%c7, %c0_16] : memref<9x256xf32, #tpu.memory_space<vmem>>, vector<1x256xf32>
    %34 = vector.broadcast %33 : vector<1x256xf32> to vector<8x256xf32>
    %35 = arith.mulf %32, %34 : vector<8x256xf32>
    %c56 = arith.constant 56 : index
    %c0_17 = arith.constant 0 : index
    %36 = vector.load %arg12[%c56, %c0_17] : memref<72x256xf32, #tpu.memory_space<vmem>>, vector<8x256xf32>
    tpu.vector_store %arg12[%c56, %c0_17], %35 {strides = array<i32>} : memref<72x256xf32, #tpu.memory_space<vmem>>, vector<8x256xf32>,
    %c239_i32 = arith.constant 239 : i32
    %37 = tpu.dynamic_rotate %0 by %c239_i32 dim 1 : vector<8x256xf32>, i32 -> vector<8x256xf32>
    %c8_18 = arith.constant 8 : index
    %c0_19 = arith.constant 0 : index
    %38 = vector.load %arg1[%c8_18, %c0_19] : memref<9x256xf32, #tpu.memory_space<vmem>>, vector<1x256xf32>
    %39 = vector.broadcast %38 : vector<1x256xf32> to vector<8x256xf32>
    %40 = arith.mulf %37, %39 : vector<8x256xf32>
    %c64 = arith.constant 64 : index
    %c0_20 = arith.constant 0 : index
    %41 = vector.load %arg12[%c64, %c0_20] : memref<72x256xf32, #tpu.memory_space<vmem>>, vector<8x256xf32>
    tpu.vector_store %arg12[%c64, %c0_20], %40 {strides = array<i32>} : memref<72x256xf32, #tpu.memory_space<vmem>>, vector<8x256xf32>,
    %c0_21 = arith.constant 0 : index
    %c0_22 = arith.constant 0 : index
    %42 = vector.load %arg3[%c0_21, %c0_22] : memref<8x72xf32, #tpu.memory_space<vmem>>, vector<8x72xf32>
    %c0_23 = arith.constant 0 : index
    %c0_24 = arith.constant 0 : index
    %43 = vector.load %arg12[%c0_23, %c0_24] : memref<72x256xf32, #tpu.memory_space<vmem>>, vector<72x256xf32>
    %cst = arith.constant dense<0.000000e+00> : vector<8x256xf32>
    %44 = tpu.matmul %42, %43, %cst {dimension_numbers = #tpu.dot_dimension_numbers<[1], [0], [0], [1], [0, 0, 1, 1], [], []>} : vector<8x72xf32>, vector<72x256xf32>, vector<8x256xf32> -> vector<8x256xf32>
    %c0_25 = arith.constant 0 : index
    %c0_26 = arith.constant 0 : index
    %45 = vector.load %arg4[%c0_25, %c0_26] : memref<8x1xf32, #tpu.memory_space<vmem>>, vector<8x1xf32>
    %46 = vector.broadcast %45 : vector<8x1xf32> to vector<8x256xf32>
    %47 = arith.addf %44, %46 : vector<8x256xf32>
    %cst_27 = arith.constant -5.000000e+00 : f32
    %cst_28 = arith.constant 5.000000e+00 : f32
    %48 = vector.broadcast %cst_27 : f32 to vector<8x256xf32>
    %49 = arith.maximumf %48, %47 : vector<8x256xf32>
    %50 = vector.broadcast %cst_28 : f32 to vector<8x256xf32>
    %51 = arith.minimumf %50, %49 : vector<8x256xf32>
    %52 = arith.subf %47, %51 : vector<8x256xf32>
    %cst_29 = arith.constant 0.00999999977 : f32
    %53 = vector.broadcast %cst_29 : f32 to vector<8x256xf32>
    %54 = arith.mulf %53, %52 : vector<8x256xf32>
    %55 = arith.addf %51, %54 : vector<8x256xf32>
    %c17_i32_30 = arith.constant 17 : i32
    %56 = tpu.dynamic_rotate %55 by %c17_i32_30 dim 1 : vector<8x256xf32>, i32 -> vector<8x256xf32>
    %c0_31 = arith.constant 0 : index
    %c0_32 = arith.constant 0 : index
    %57 = vector.load %arg1[%c0_31, %c0_32] : memref<9x256xf32, #tpu.memory_space<vmem>>, vector<1x256xf32>
    %58 = vector.broadcast %57 : vector<1x256xf32> to vector<8x256xf32>
    %59 = arith.mulf %56, %58 : vector<8x256xf32>
    %c0_33 = arith.constant 0 : index
    %c0_34 = arith.constant 0 : index
    %60 = vector.load %arg12[%c0_33, %c0_34] : memref<72x256xf32, #tpu.memory_space<vmem>>, vector<8x256xf32>
    tpu.vector_store %arg12[%c0_33, %c0_34], %59 {strides = array<i32>} : memref<72x256xf32, #tpu.memory_space<vmem>>, vector<8x256xf32>,
    %c16_i32_35 = arith.constant 16 : i32
    %61 = tpu.dynamic_rotate %55 by %c16_i32_35 dim 1 : vector<8x256xf32>, i32 -> vector<8x256xf32>
    %c1_36 = arith.constant 1 : index
    %c0_37 = arith.constant 0 : index
    %62 = vector.load %arg1[%c1_36, %c0_37] : memref<9x256xf32, #tpu.memory_space<vmem>>, vector<1x256xf32>
    %63 = vector.broadcast %62 : vector<1x256xf32> to vector<8x256xf32>
    %64 = arith.mulf %61, %63 : vector<8x256xf32>
    %c8_38 = arith.constant 8 : index
    %c0_39 = arith.constant 0 : index
    %65 = vector.load %arg12[%c8_38, %c0_39] : memref<72x256xf32, #tpu.memory_space<vmem>>, vector<8x256xf32>
    tpu.vector_store %arg12[%c8_38, %c0_39], %64 {strides = array<i32>} : memref<72x256xf32, #tpu.memory_space<vmem>>, vector<8x256xf32>,
    %c15_i32_40 = arith.constant 15 : i32
    %66 = tpu.dynamic_rotate %55 by %c15_i32_40 dim 1 : vector<8x256xf32>, i32 -> vector<8x256xf32>
    %c2_41 = arith.constant 2 : index
    %c0_42 = arith.constant 0 : index
    %67 = vector.load %arg1[%c2_41, %c0_42] : memref<9x256xf32, #tpu.memory_space<vmem>>, vector<1x256xf32>
    %68 = vector.broadcast %67 : vector<1x256xf32> to vector<8x256xf32>
    %69 = arith.mulf %66, %68 : vector<8x256xf32>
    %c16_43 = arith.constant 16 : index
    %c0_44 = arith.constant 0 : index
    %70 = vector.load %arg12[%c16_43, %c0_44] : memref<72x256xf32, #tpu.memory_space<vmem>>, vector<8x256xf32>
    tpu.vector_store %arg12[%c16_43, %c0_44], %69 {strides = array<i32>} : memref<72x256xf32, #tpu.memory_space<vmem>>, vector<8x256xf32>,
    %c1_i32_45 = arith.constant 1 : i32
    %71 = tpu.dynamic_rotate %55 by %c1_i32_45 dim 1 : vector<8x256xf32>, i32 -> vector<8x256xf32>
    %c3_46 = arith.constant 3 : index
    %c0_47 = arith.constant 0 : index
    %72 = vector.load %arg1[%c3_46, %c0_47] : memref<9x256xf32, #tpu.memory_space<vmem>>, vector<1x256xf32>
    %73 = vector.broadcast %72 : vector<1x256xf32> to vector<8x256xf32>
    %74 = arith.mulf %71, %73 : vector<8x256xf32>
    %c24_48 = arith.constant 24 : index
    %c0_49 = arith.constant 0 : index
    %75 = vector.load %arg12[%c24_48, %c0_49] : memref<72x256xf32, #tpu.memory_space<vmem>>, vector<8x256xf32>
    tpu.vector_store %arg12[%c24_48, %c0_49], %74 {strides = array<i32>} : memref<72x256xf32, #tpu.memory_space<vmem>>, vector<8x256xf32>,
    %c32_50 = arith.constant 32 : index
    %c0_51 = arith.constant 0 : index
    %76 = vector.load %arg12[%c32_50, %c0_51] : memref<72x256xf32, #tpu.memory_space<vmem>>, vector<8x256xf32>
    tpu.vector_store %arg12[%c32_50, %c0_51], %55 {strides = array<i32>} : memref<72x256xf32, #tpu.memory_space<vmem>>, vector<8x256xf32>,
    %c255_i32_52 = arith.constant 255 : i32
    %77 = tpu.dynamic_rotate %55 by %c255_i32_52 dim 1 : vector<8x256xf32>, i32 -> vector<8x256xf32>
    %c5_53 = arith.constant 5 : index
    %c0_54 = arith.constant 0 : index
    %78 = vector.load %arg1[%c5_53, %c0_54] : memref<9x256xf32, #tpu.memory_space<vmem>>, vector<1x256xf32>
    %79 = vector.broadcast %78 : vector<1x256xf32> to vector<8x256xf32>
    %80 = arith.mulf %77, %79 : vector<8x256xf32>
    %c40_55 = arith.constant 40 : index
    %c0_56 = arith.constant 0 : index
    %81 = vector.load %arg12[%c40_55, %c0_56] : memref<72x256xf32, #tpu.memory_space<vmem>>, vector<8x256xf32>
    tpu.vector_store %arg12[%c40_55, %c0_56], %80 {strides = array<i32>} : memref<72x256xf32, #tpu.memory_space<vmem>>, vector<8x256xf32>,
    %c241_i32_57 = arith.constant 241 : i32
    %82 = tpu.dynamic_rotate %55 by %c241_i32_57 dim 1 : vector<8x256xf32>, i32 -> vector<8x256xf32>
    %c6_58 = arith.constant 6 : index
    %c0_59 = arith.constant 0 : index
    %83 = vector.load %arg1[%c6_58, %c0_59] : memref<9x256xf32, #tpu.memory_space<vmem>>, vector<1x256xf32>
    %84 = vector.broadcast %83 : vector<1x256xf32> to vector<8x256xf32>
    %85 = arith.mulf %82, %84 : vector<8x256xf32>
    %c48_60 = arith.constant 48 : index
    %c0_61 = arith.constant 0 : index
    %86 = vector.load %arg12[%c48_60, %c0_61] : memref<72x256xf32, #tpu.memory_space<vmem>>, vector<8x256xf32>
    tpu.vector_store %arg12[%c48_60, %c0_61], %85 {strides = array<i32>} : memref<72x256xf32, #tpu.memory_space<vmem>>, vector<8x256xf32>,
    %c240_i32_62 = arith.constant 240 : i32
    %87 = tpu.dynamic_rotate %55 by %c240_i32_62 dim 1 : vector<8x256xf32>, i32 -> vector<8x256xf32>
    %c7_63 = arith.constant 7 : index
    %c0_64 = arith.constant 0 : index
    %88 = vector.load %arg1[%c7_63, %c0_64] : memref<9x256xf32, #tpu.memory_space<vmem>>, vector<1x256xf32>
    %89 = vector.broadcast %88 : vector<1x256xf32> to vector<8x256xf32>
    %90 = arith.mulf %87, %89 : vector<8x256xf32>
    %c56_65 = arith.constant 56 : index
    %c0_66 = arith.constant 0 : index
    %91 = vector.load %arg12[%c56_65, %c0_66] : memref<72x256xf32, #tpu.memory_space<vmem>>, vector<8x256xf32>
    tpu.vector_store %arg12[%c56_65, %c0_66], %90 {strides = array<i32>} : memref<72x256xf32, #tpu.memory_space<vmem>>, vector<8x256xf32>,
    %c239_i32_67 = arith.constant 239 : i32
    %92 = tpu.dynamic_rotate %55 by %c239_i32_67 dim 1 : vector<8x256xf32>, i32 -> vector<8x256xf32>
    %c8_68 = arith.constant 8 : index
    %c0_69 = arith.constant 0 : index
    %93 = vector.load %arg1[%c8_68, %c0_69] : memref<9x256xf32, #tpu.memory_space<vmem>>, vector<1x256xf32>
    %94 = vector.broadcast %93 : vector<1x256xf32> to vector<8x256xf32>
    %95 = arith.mulf %92, %94 : vector<8x256xf32>
    %c64_70 = arith.constant 64 : index
    %c0_71 = arith.constant 0 : index
    %96 = vector.load %arg12[%c64_70, %c0_71] : memref<72x256xf32, #tpu.memory_space<vmem>>, vector<8x256xf32>
    tpu.vector_store %arg12[%c64_70, %c0_71], %95 {strides = array<i32>} : memref<72x256xf32, #tpu.memory_space<vmem>>, vector<8x256xf32>,
    %c0_72 = arith.constant 0 : index
    %c0_73 = arith.constant 0 : index
    %97 = vector.load %arg5[%c0_72, %c0_73] : memref<16x72xf32, #tpu.memory_space<vmem>>, vector<16x72xf32>
    %c0_74 = arith.constant 0 : index
    %c0_75 = arith.constant 0 : index
    %98 = vector.load %arg12[%c0_74, %c0_75] : memref<72x256xf32, #tpu.memory_space<vmem>>, vector<72x256xf32>
    %cst_76 = arith.constant dense<0.000000e+00> : vector<16x256xf32>
    %99 = tpu.matmul %97, %98, %cst_76 {dimension_numbers = #tpu.dot_dimension_numbers<[1], [0], [0], [1], [0, 0, 1, 1], [], []>} : vector<16x72xf32>, vector<72x256xf32>, vector<16x256xf32> -> vector<16x256xf32>
    %c0_77 = arith.constant 0 : index
    %c0_78 = arith.constant 0 : index
    %100 = vector.load %arg6[%c0_77, %c0_78] : memref<16x1xf32, #tpu.memory_space<vmem>>, vector<16x1xf32>
    %101 = vector.broadcast %100 : vector<16x1xf32> to vector<16x256xf32>
    %102 = arith.addf %99, %101 : vector<16x256xf32>
    %cst_79 = arith.constant -5.000000e+00 : f32
    %cst_80 = arith.constant 5.000000e+00 : f32
    %103 = vector.broadcast %cst_79 : f32 to vector<16x256xf32>
    %104 = arith.maximumf %103, %102 : vector<16x256xf32>
    %105 = vector.broadcast %cst_80 : f32 to vector<16x256xf32>
    %106 = arith.minimumf %105, %104 : vector<16x256xf32>
    %107 = arith.subf %102, %106 : vector<16x256xf32>
    %cst_81 = arith.constant 0.00999999977 : f32
    %108 = vector.broadcast %cst_81 : f32 to vector<16x256xf32>
    %109 = arith.mulf %108, %107 : vector<16x256xf32>
    %110 = arith.addf %106, %109 : vector<16x256xf32>
    %cst_82 = arith.constant dense<0xFF800000> : vector<16xf32>
    %111 = vector.multi_reduction <maximumf>, %110, %cst_82 [1] : vector<16x256xf32> to vector<16xf32>
    %112 = vector.shape_cast %111 : vector<16xf32> to vector<16x1xf32>
    %c0_83 = arith.constant 0 : index
    %c0_84 = arith.constant 0 : index
    %113 = vector.load %arg13[%c0_83, %c0_84] : memref<16x1xf32, #tpu.memory_space<vmem>>, vector<16x1xf32>
    tpu.vector_store %arg13[%c0_83, %c0_84], %112 {strides = array<i32>} : memref<16x1xf32, #tpu.memory_space<vmem>>, vector<16x1xf32>,
    %c0_85 = arith.constant 0 : index
    %c0_86 = arith.constant 0 : index
    %114 = vector.load %arg13[%c0_85, %c0_86] : memref<16x1xf32, #tpu.memory_space<vmem>>, vector<16x1xf32>
    %c0_87 = arith.constant 0 : index
    %c0_88 = arith.constant 0 : index
    %115 = vector.load %arg7[%c0_87, %c0_88] : memref<32x16xf32, #tpu.memory_space<vmem>>, vector<32x16xf32>
    %cst_89 = arith.constant dense<0.000000e+00> : vector<32x1xf32>
    %116 = tpu.matmul %115, %114, %cst_89 {dimension_numbers = #tpu.dot_dimension_numbers<[1], [0], [0], [1], [0, 0, 1, 1], [], []>} : vector<32x16xf32>, vector<16x1xf32>, vector<32x1xf32> -> vector<32x1xf32>
    %c0_90 = arith.constant 0 : index
    %c0_91 = arith.constant 0 : index
    %117 = vector.load %arg8[%c0_90, %c0_91] : memref<32x1xf32, #tpu.memory_space<vmem>>, vector<32x1xf32>
    %118 = arith.addf %116, %117 : vector<32x1xf32>
    %cst_92 = arith.constant -5.000000e+00 : f32
    %cst_93 = arith.constant 5.000000e+00 : f32
    %119 = vector.broadcast %cst_92 : f32 to vector<32x1xf32>
    %120 = arith.maximumf %119, %118 : vector<32x1xf32>
    %121 = vector.broadcast %cst_93 : f32 to vector<32x1xf32>
    %122 = arith.minimumf %121, %120 : vector<32x1xf32>
    %123 = arith.subf %118, %122 : vector<32x1xf32>
    %cst_94 = arith.constant 0.00999999977 : f32
    %124 = vector.broadcast %cst_94 : f32 to vector<32x1xf32>
    %125 = arith.mulf %124, %123 : vector<32x1xf32>
    %126 = arith.addf %122, %125 : vector<32x1xf32>
    %c0_95 = arith.constant 0 : index
    %c0_96 = arith.constant 0 : index
    %127 = vector.load %arg9[%c0_95, %c0_96] : memref<10x32xf32, #tpu.memory_space<vmem>>, vector<10x32xf32>
    %cst_97 = arith.constant dense<0.000000e+00> : vector<10x1xf32>
    %128 = tpu.matmul %127, %126, %cst_97 {dimension_numbers = #tpu.dot_dimension_numbers<[1], [0], [0], [1], [0, 0, 1, 1], [], []>} : vector<10x32xf32>, vector<32x1xf32>, vector<10x1xf32> -> vector<10x1xf32>
    %c0_98 = arith.constant 0 : index
    %c0_99 = arith.constant 0 : index
    %129 = vector.load %arg10[%c0_98, %c0_99] : memref<10x1xf32, #tpu.memory_space<vmem>>, vector<10x1xf32>
    %130 = arith.addf %128, %129 : vector<10x1xf32>
    %c0_100 = arith.constant 0 : index
    %c0_101 = arith.constant 0 : index
    %c0_102 = arith.constant 0 : index
    %131 = vector.load %arg11[%c0_100, %c0_101, %c0_102] : memref<1x10x1xf32, #tpu.memory_space<vmem>>, vector<1x10x1xf32>
    %132 = vector.shape_cast %131 : vector<1x10x1xf32> to vector<10x1xf32>
    %133 = vector.shape_cast %130 : vector<10x1xf32> to vector<1x10x1xf32>
    tpu.vector_store %arg11[%c0_100, %c0_101, %c0_102], %133 {strides = array<i32>} : memref<1x10x1xf32, #tpu.memory_space<vmem>>, vector<1x10x1xf32>,
    return
  }
  func.func @transform_0(%arg0: i32) -> (i32, i32) {
    %c0_i32 = arith.constant 0 : i32
    %c0_i32_0 = arith.constant 0 : i32
    %c0_i32_1 = arith.constant 0 : i32
    return %c0_i32, %c0_i32_0 : i32, i32
  }
  func.func @transform_1(%arg0: i32) -> (i32, i32) {
    %c0_i32 = arith.constant 0 : i32
    %c0_i32_0 = arith.constant 0 : i32
    return %c0_i32, %arg0 : i32, i32
  }
  func.func @transform_2(%arg0: i32) -> (i32, i32) {
    %c0_i32 = arith.constant 0 : i32
    %c0_i32_0 = arith.constant 0 : i32
    %c0_i32_1 = arith.constant 0 : i32
    return %c0_i32, %c0_i32_0 : i32, i32
  }
  func.func @transform_3(%arg0: i32) -> (i32, i32) {
    %c0_i32 = arith.constant 0 : i32
    %c0_i32_0 = arith.constant 0 : i32
    %c0_i32_1 = arith.constant 0 : i32
    return %c0_i32, %c0_i32_0 : i32, i32
  }
  func.func @transform_4(%arg0: i32) -> (i32, i32) {
    %c0_i32 = arith.constant 0 : i32
    %c0_i32_0 = arith.constant 0 : i32
    %c0_i32_1 = arith.constant 0 : i32
    return %c0_i32, %c0_i32_0 : i32, i32
  }
  func.func @transform_5(%arg0: i32) -> (i32, i32) {
    %c0_i32 = arith.constant 0 : i32
    %c0_i32_0 = arith.constant 0 : i32
    %c0_i32_1 = arith.constant 0 : i32
    return %c0_i32, %c0_i32_0 : i32, i32
  }
  func.func @transform_6(%arg0: i32) -> (i32, i32) {
    %c0_i32 = arith.constant 0 : i32
    %c0_i32_0 = arith.constant 0 : i32
    %c0_i32_1 = arith.constant 0 : i32
    return %c0_i32, %c0_i32_0 : i32, i32
  }
  func.func @transform_7(%arg0: i32) -> (i32, i32) {
    %c0_i32 = arith.constant 0 : i32
    %c0_i32_0 = arith.constant 0 : i32
    %c0_i32_1 = arith.constant 0 : i32
    return %c0_i32, %c0_i32_0 : i32, i32
  }
  func.func @transform_8(%arg0: i32) -> (i32, i32) {
    %c0_i32 = arith.constant 0 : i32
    %c0_i32_0 = arith.constant 0 : i32
    %c0_i32_1 = arith.constant 0 : i32
    return %c0_i32, %c0_i32_0 : i32, i32
  }
  func.func @transform_9(%arg0: i32) -> (i32, i32) {
    %c0_i32 = arith.constant 0 : i32
    %c0_i32_0 = arith.constant 0 : i32
    %c0_i32_1 = arith.constant 0 : i32
    return %c0_i32, %c0_i32_0 : i32, i32
  }
  func.func @transform_10(%arg0: i32) -> (i32, i32, i32) {
    %c0_i32 = arith.constant 0 : i32
    %c0_i32_0 = arith.constant 0 : i32
    %c0_i32_1 = arith.constant 0 : i32
    return %arg0, %c0_i32, %c0_i32_0 : i32, i32, i32
  }
}

</mosaic_0001>

<llo_original>
// kernel: sub.8
$region0: #{sub.8}
  #allocation0 [shape = 's32[1]{0}', space=sflag, size = 0x4, scoped, tag = 'scoped memory for sub.8']
  %s0 = inlined_call_operand.vmem [shape: f32[8,4,3,3], index: 0, kind: input, shape index: {}]
  %s1 = inlined_call_operand.vmem [shape: f32[8,4,3,3], index: 1, kind: input, shape index: {}]
  %s2 = inlined_call_operand.vmem [shape: f32[8,4,3,3], index: 2, kind: output, shape index: {}]
  %v3 = vld [vmem:[%s0] sm:$0xf]
  %v4 = vld [vmem:[%s1] sm:$0xf]
  %5 = xla_tuple %v3, %v4
  %6 = xla_tuple %5
  %v7 = vsub.f32 %v3, %v4
  %8 = xla_tuple %v7
  %9 = vst [vmem:[%s2] sm:$0xf] %v7
  %s10 = scalar_lea.vmem %s0, 12
  %v11 = vld [vmem:[%s10] sm:$0xf]
  %s12 = scalar_lea.vmem %s1, 12
  %v13 = vld [vmem:[%s12] sm:$0xf]
  %14 = xla_tuple %v11, %v13
  %15 = xla_tuple %14
  %v16 = vsub.f32 %v11, %v13
  %17 = xla_tuple %v16
  %s18 = scalar_lea.vmem %s2, 12
  %19 = vst [vmem:[%s18] sm:$0xf] %v16
  %s20 = scalar_lea.vmem %s0, 24
  %v21 = vld [vmem:[%s20] sm:$0xf]
  %s22 = scalar_lea.vmem %s1, 24
  %v23 = vld [vmem:[%s22] sm:$0xf]
  %24 = xla_tuple %v21, %v23
  %25 = xla_tuple %24
  %v26 = vsub.f32 %v21, %v23
  %27 = xla_tuple %v26
  %s28 = scalar_lea.vmem %s2, 24
  %29 = vst [vmem:[%s28] sm:$0xf] %v26
  %s30 = scalar_lea.vmem %s0, 4
  %v31 = vld [vmem:[%s30] sm:$0xf]
  %s32 = scalar_lea.vmem %s1, 4
  %v33 = vld [vmem:[%s32] sm:$0xf]
  %34 = xla_tuple %v31, %v33
  %35 = xla_tuple %34
  %v36 = vsub.f32 %v31, %v33
  %37 = xla_tuple %v36
  %s38 = scalar_lea.vmem %s2, 4
  %39 = vst [vmem:[%s38] sm:$0xf] %v36
  %s40 = scalar_lea.vmem %s0, 16
  %v41 = vld [vmem:[%s40] sm:$0xf]
  %s42 = scalar_lea.vmem %s1, 16
  %v43 = vld [vmem:[%s42] sm:$0xf]
  %44 = xla_tuple %v41, %v43
  %45 = xla_tuple %44
  %v46 = vsub.f32 %v41, %v43
  %47 = xla_tuple %v46
  %s48 = scalar_lea.vmem %s2, 16
  %49 = vst [vmem:[%s48] sm:$0xf] %v46
  %s50 = scalar_lea.vmem %s0, 28
  %v51 = vld [vmem:[%s50] sm:$0xf]
  %s52 = scalar_lea.vmem %s1, 28
  %v53 = vld [vmem:[%s52] sm:$0xf]
  %54 = xla_tuple %v51, %v53
  %55 = xla_tuple %54
  %v56 = vsub.f32 %v51, %v53
  %57 = xla_tuple %v56
  %s58 = scalar_lea.vmem %s2, 28
  %59 = vst [vmem:[%s58] sm:$0xf] %v56
  %s60 = scalar_lea.vmem %s0, 8
  %v61 = vld [vmem:[%s60] sm:$0xf]
  %s62 = scalar_lea.vmem %s1, 8
  %v63 = vld [vmem:[%s62] sm:$0xf]
  %64 = xla_tuple %v61, %v63
  %65 = xla_tuple %64
  %v66 = vsub.f32 %v61, %v63
  %67 = xla_tuple %v66
  %s68 = scalar_lea.vmem %s2, 8
  %69 = vst [vmem:[%s68] sm:$0xf] %v66
  %s70 = scalar_lea.vmem %s0, 20
  %v71 = vld [vmem:[%s70] sm:$0xf]
  %s72 = scalar_lea.vmem %s1, 20
  %v73 = vld [vmem:[%s72] sm:$0xf]
  %74 = xla_tuple %v71, %v73
  %75 = xla_tuple %74
  %v76 = vsub.f32 %v71, %v73
  %77 = xla_tuple %v76
  %s78 = scalar_lea.vmem %s2, 20
  %79 = vst [vmem:[%s78] sm:$0xf] %v76
  %s80 = scalar_lea.vmem %s0, 32
  %v81 = vld [vmem:[%s80] sm:$0xf]
  %s82 = scalar_lea.vmem %s1, 32
  %v83 = vld [vmem:[%s82] sm:$0xf]
  %84 = xla_tuple %v81, %v83
  %85 = xla_tuple %84
  %v86 = vsub.f32 %v81, %v83
  %87 = xla_tuple %v86
  %s88 = scalar_lea.vmem %s2, 32
  %89 = vst [vmem:[%s88] sm:$0xf] %v86

// kernel: sub.9
$region0: #{sub.9}
  #allocation0 [shape = 's32[1]{0}', space=sflag, size = 0x4, scoped, tag = 'scoped memory for sub.9']
  %s0 = inlined_call_operand.vmem [shape: f32[16,8,3,3], index: 0, kind: input, shape index: {}]
  %s1 = inlined_call_operand.vmem [shape: f32[16,8,3,3], index: 1, kind: input, shape index: {}]
  %s2 = inlined_call_operand.vmem [shape: f32[16,8,3,3], index: 2, kind: output, shape index: {}]
  %v3 = vld [vmem:[%s0] sm:$0xff]
  %v4 = vld [vmem:[%s1] sm:$0xff]
  %5 = xla_tuple %v3, %v4
  %6 = xla_tuple %5
  %v7 = vsub.f32 %v3, %v4
  %8 = xla_tuple %v7
  %9 = vst [vmem:[%s2] sm:$0xff] %v7
  %s10 = scalar_lea.vmem %s0, 24
  %v11 = vld [vmem:[%s10] sm:$0xff]
  %s12 = scalar_lea.vmem %s1, 24
  %v13 = vld [vmem:[%s12] sm:$0xff]
  %14 = xla_tuple %v11, %v13
  %15 = xla_tuple %14
  %v16 = vsub.f32 %v11, %v13
  %17 = xla_tuple %v16
  %s18 = scalar_lea.vmem %s2, 24
  %19 = vst [vmem:[%s18] sm:$0xff] %v16
  %s20 = scalar_lea.vmem %s0, 48
  %v21 = vld [vmem:[%s20] sm:$0xff]
  %s22 = scalar_lea.vmem %s1, 48
  %v23 = vld [vmem:[%s22] sm:$0xff]
  %24 = xla_tuple %v21, %v23
  %25 = xla_tuple %24
  %v26 = vsub.f32 %v21, %v23
  %27 = xla_tuple %v26
  %s28 = scalar_lea.vmem %s2, 48
  %29 = vst [vmem:[%s28] sm:$0xff] %v26
  %s30 = scalar_lea.vmem %s0, 8
  %v31 = vld [vmem:[%s30] sm:$0xff]
  %s32 = scalar_lea.vmem %s1, 8
  %v33 = vld [vmem:[%s32] sm:$0xff]
  %34 = xla_tuple %v31, %v33
  %35 = xla_tuple %34
  %v36 = vsub.f32 %v31, %v33
  %37 = xla_tuple %v36
  %s38 = scalar_lea.vmem %s2, 8
  %39 = vst [vmem:[%s38] sm:$0xff] %v36
  %s40 = scalar_lea.vmem %s0, 32
  %v41 = vld [vmem:[%s40] sm:$0xff]
  %s42 = scalar_lea.vmem %s1, 32
  %v43 = vld [vmem:[%s42] sm:$0xff]
  %44 = xla_tuple %v41, %v43
  %45 = xla_tuple %44
  %v46 = vsub.f32 %v41, %v43
  %47 = xla_tuple %v46
  %s48 = scalar_lea.vmem %s2, 32
  %49 = vst [vmem:[%s48] sm:$0xff] %v46
  %s50 = scalar_lea.vmem %s0, 56
  %v51 = vld [vmem:[%s50] sm:$0xff]
  %s52 = scalar_lea.vmem %s1, 56
  %v53 = vld [vmem:[%s52] sm:$0xff]
  %54 = xla_tuple %v51, %v53
  %55 = xla_tuple %54
  %v56 = vsub.f32 %v51, %v53
  %57 = xla_tuple %v56
  %s58 = scalar_lea.vmem %s2, 56
  %59 = vst [vmem:[%s58] sm:$0xff] %v56
  %s60 = scalar_lea.vmem %s0, 16
  %v61 = vld [vmem:[%s60] sm:$0xff]
  %s62 = scalar_lea.vmem %s1, 16
  %v63 = vld [vmem:[%s62] sm:$0xff]
  %64 = xla_tuple %v61, %v63
  %65 = xla_tuple %64
  %v66 = vsub.f32 %v61, %v63
  %67 = xla_tuple %v66
  %s68 = scalar_lea.vmem %s2, 16
  %69 = vst [vmem:[%s68] sm:$0xff] %v66
  %s70 = scalar_lea.vmem %s0, 40
  %v71 = vld [vmem:[%s70] sm:$0xff]
  %s72 = scalar_lea.vmem %s1, 40
  %v73 = vld [vmem:[%s72] sm:$0xff]
  %74 = xla_tuple %v71, %v73
  %75 = xla_tuple %74
  %v76 = vsub.f32 %v71, %v73
  %77 = xla_tuple %v76
  %s78 = scalar_lea.vmem %s2, 40
  %79 = vst [vmem:[%s78] sm:$0xff] %v76
  %s80 = scalar_lea.vmem %s0, 64
  %v81 = vld [vmem:[%s80] sm:$0xff]
  %s82 = scalar_lea.vmem %s1, 64
  %v83 = vld [vmem:[%s82] sm:$0xff]
  %84 = xla_tuple %v81, %v83
  %85 = xla_tuple %84
  %v86 = vsub.f32 %v81, %v83
  %87 = xla_tuple %v86
  %s88 = scalar_lea.vmem %s2, 64
  %89 = vst [vmem:[%s88] sm:$0xff] %v86

// kernel: sub.10
$region0: #{sub.10}
  #allocation0 [shape = 's32[1]{0}', space=sflag, size = 0x4, scoped, tag = 'scoped memory for sub.10']
  %s0 = inlined_call_operand.vmem [shape: f32[32,16], index: 0, kind: input, shape index: {}]
  %s1 = inlined_call_operand.vmem [shape: f32[32,16], index: 1, kind: input, shape index: {}]
  %s2 = inlined_call_operand.vmem [shape: f32[32,16], index: 2, kind: output, shape index: {}]
  %v3 = vld [vmem:[%s0] sm:$0xff]
  %v4 = vld [vmem:[%s1] sm:$0xff]
  %5 = xla_tuple %v3, %v4
  %6 = xla_tuple %5
  %v7 = vsub.f32 %v3, %v4
  %8 = xla_tuple %v7
  %9 = vst [vmem:[%s2] sm:$0xff] %v7
  %s10 = scalar_lea.vmem %s0, 8
  %v11 = vld [vmem:[%s10] sm:$0xff]
  %s12 = scalar_lea.vmem %s1, 8
  %v13 = vld [vmem:[%s12] sm:$0xff]
  %14 = xla_tuple %v11, %v13
  %15 = xla_tuple %14
  %v16 = vsub.f32 %v11, %v13
  %17 = xla_tuple %v16
  %s18 = scalar_lea.vmem %s2, 8
  %19 = vst [vmem:[%s18] sm:$0xff] %v16

// kernel: sub.11
$region0: #{sub.11}
  #allocation0 [shape = 's32[1]{0}', space=sflag, size = 0x4, scoped, tag = 'scoped memory for sub.11']
  %s0 = inlined_call_operand.vmem [shape: f32[10,32], index: 0, kind: input, shape index: {}]
  %s1 = inlined_call_operand.vmem [shape: f32[10,32], index: 1, kind: input, shape index: {}]
  %s2 = inlined_call_operand.vmem [shape: f32[10,32], index: 2, kind: output, shape index: {}]
  %v3 = vld [vmem:[%s0] sm:$0xff]
  %v4 = vld [vmem:[%s1] sm:$0xff]
  %5 = xla_tuple %v3, %v4
  %6 = xla_tuple %5
  %v7 = vsub.f32 %v3, %v4
  %8 = xla_tuple %v7
  %9 = vst [vmem:[%s2] sm:$0xff] %v7
  %s10 = scalar_lea.vmem %s0, 8
  %v11 = vld [vmem:[%s10] sm:$0xff]
  %s12 = scalar_lea.vmem %s1, 8
  %v13 = vld [vmem:[%s12] sm:$0xff]
  %14 = xla_tuple %v11, %v13
  %15 = xla_tuple %14
  %v16 = vsub.f32 %v11, %v13
  %17 = xla_tuple %v16
  %s18 = scalar_lea.vmem %s2, 8
  %19 = vst [vmem:[%s18] sm:$0xff] %v16

// kernel: conv_dense_abba_forward.1
$region0: #{conv_dense_abba_forward.1}
  #allocation0 [shape = 'u32[]', space=smem, size = 0x4, offset = 0x4, fixed_abs, tag = 'smem constant byte address 0x4 - core index']
  #allocation1 [shape = 'u32[144,128]{1,0:T(1,128)}', space=vmem, size = 0x12000, scoped, tag = 'internal scratch']
  #allocation2 [shape = 'f32[72,256]{1,0:T(8,128)}', space=vmem, size = 0x12000, scoped, tag = 'scratch operand']
  #allocation3 [shape = 'f32[16,1]{1,0:T(8,128)}', space=vmem, size = 0x2000, scoped, tag = 'scratch operand']
  %s0 = inlined_call_operand.vmem [shape: f32[9,256], index: 0, kind: input, shape index: {}]
  %s1 = inlined_call_operand.vmem [shape: f32[8,512], index: 1, kind: input, shape index: {}]
  %s2 = inlined_call_operand.vmem [shape: f32[8,72], index: 2, kind: input, shape index: {}]
  %s3 = inlined_call_operand.vmem [shape: f32[8,1], index: 3, kind: input, shape index: {}]
  %s4 = inlined_call_operand.vmem [shape: f32[16,72], index: 4, kind: input, shape index: {}]
  %s5 = inlined_call_operand.vmem [shape: f32[16,1], index: 5, kind: input, shape index: {}]
  %s6 = inlined_call_operand.vmem [shape: f32[32,16], index: 6, kind: input, shape index: {}]
  %s7 = inlined_call_operand.vmem [shape: f32[32,1], index: 7, kind: input, shape index: {}]
  %s8 = inlined_call_operand.vmem [shape: f32[10,32], index: 8, kind: input, shape index: {}]
  %s9 = inlined_call_operand.vmem [shape: f32[10,1], index: 9, kind: input, shape index: {}]
  %s10 = inlined_call_operand.vmem [shape: f32[2,10,1], index: 10, kind: output, shape index: {}]
  %s11 = sld [smem:[#allocation0]]
  $region73: #{conv_dense_abba_forward.1} parent=0
    _
  %s13 = ssub.s32 1, %s11
  %s14 = scalar_select 0, %s13, %s11
  loop: start=0, step=1, limit=4
  $region2: #{conv_dense_abba_forward.1} parent=0 // loop_pre_header
    _
  $region3: #{conv_dense_abba_forward.1} parent=0 // loop_header
    %s16 = sphi 0, %s20
    %p17 = scmp.ge.s32.totalorder %s16, 4
    %s24 = sphi 0, %s24
    %s26 = sphi 0, %s24
    %s27 = sphi 0, %s26
    %s41 = sphi 0, %s27
    %s47 = sphi 0, %s49
    %s50 = sphi 0, %s47
    %s51 = sphi 0, %s50
    %s67 = sphi 0, %s51
    %s71 = sphi 0, %s71
    %s73 = sphi 0, %s71
    %s74 = sphi 0, %s73
    %s88 = sphi 0, %s74
    %s92 = sphi 0, %s92
    %s94 = sphi 0, %s92
    %s95 = sphi 0, %s94
    %s109 = sphi 0, %s95
    %s113 = sphi 0, %s113
    %s115 = sphi 0, %s113
    %s116 = sphi 0, %s115
    %s130 = sphi 0, %s116
    %s134 = sphi 0, %s134
    %s136 = sphi 0, %s134
    %s137 = sphi 0, %s136
    %s151 = sphi 0, %s137
    %s155 = sphi 0, %s155
    %s157 = sphi 0, %s155
    %s158 = sphi 0, %s157
    %s172 = sphi 0, %s158
    %s176 = sphi 0, %s176
    %s178 = sphi 0, %s176
    %s179 = sphi 0, %s178
    %s193 = sphi 0, %s179
    %s197 = sphi 0, %s197
    %s199 = sphi 0, %s197
    %s200 = sphi 0, %s199
    %s214 = sphi 0, %s200
    %s218 = sphi 0, %s218
    %s220 = sphi 0, %s218
    %s221 = sphi 0, %s220
    %s235 = sphi 0, %s221
    %s241 = sphi 0, %s243
    %s244 = sphi 0, %s241
    %s245 = sphi 0, %s244
    %s261 = sphi 0, %s245
  $region4: #{conv_dense_abba_forward.1} parent=0 // loop_header_branch
    %19 = sbr.rel (%p17) target = $region8
  $region5: #{conv_dense_abba_forward.1} parent=0 // loop_body
    %s21 = ssub.s32 %s16, 1
    %s22 = ssub.s32 %s16, 2
    %s23 = sadd.s32 %s16, 1
    %s25 = sadd.s32 %s24, 1
    %p28 = scmp.eq.s32.totalorder %s16, 1
    %p29 = scmp.ne.s32.totalorder %s24, %s26
    %p30 = scmp.eq.s32.totalorder %s16, 0
    %p31 = por %p29, %p30
    %p32 = scmp.ne.s32.totalorder %s24, %s26
    %p33 = scmp.eq.s32.totalorder %s21, 1
    %p34 = por %p32, %p33
    %p35 = scmp.ne.s32.totalorder %s26, %s27
    %p36 = scmp.eq.s32.totalorder %s21, 0
    %p37 = por %p35, %p36
    %p38 = scmp.ne.s32.totalorder %s26, %s27
    %p39 = scmp.eq.s32.totalorder %s22, 1
    %p40 = por %p38, %p39
    %p42 = scmp.ne.s32.totalorder %s27, %s41
    %p43 = scmp.eq.s32.totalorder %s22, 0
    %p44 = por %p42, %p43
    %s45 = ssub.s32 %s16, %s23
    %p46 = scmp.eq.s32.totalorder %s45, 0
    %s48 = sadd.s32 %s47, 1
    %s49 = scalar_select %p46, %s47, %s48
    %p52 = pneg %p46
    %p53 = scmp.eq.s32.totalorder %s16, 1
    %p54 = por %p52, %p53
    %p55 = scmp.ne.s32.totalorder %s47, %s50
    %p56 = scmp.eq.s32.totalorder %s16, 0
    %p57 = por %p55, %p56
    %p58 = scmp.ne.s32.totalorder %s47, %s50
    %p59 = scmp.eq.s32.totalorder %s21, 1
    %p60 = por %p58, %p59
    %p61 = scmp.ne.s32.totalorder %s50, %s51
    %p62 = scmp.eq.s32.totalorder %s21, 0
    %p63 = por %p61, %p62
    %p64 = scmp.ne.s32.totalorder %s50, %s51
    %p65 = scmp.eq.s32.totalorder %s22, 1
    %p66 = por %p64, %p65
    %p68 = scmp.ne.s32.totalorder %s51, %s67
    %p69 = scmp.eq.s32.totalorder %s22, 0
    %p70 = por %p68, %p69
    %s72 = sadd.s32 %s71, 1
    %p75 = scmp.eq.s32.totalorder %s16, 1
    %p76 = scmp.ne.s32.totalorder %s71, %s73
    %p77 = scmp.eq.s32.totalorder %s16, 0
    %p78 = por %p76, %p77
    %p79 = scmp.ne.s32.totalorder %s71, %s73
    %p80 = scmp.eq.s32.totalorder %s21, 1
    %p81 = por %p79, %p80
    %p82 = scmp.ne.s32.totalorder %s73, %s74
    %p83 = scmp.eq.s32.totalorder %s21, 0
    %p84 = por %p82, %p83
    %p85 = scmp.ne.s32.totalorder %s73, %s74
    %p86 = scmp.eq.s32.totalorder %s22, 1
    %p87 = por %p85, %p86
    %p89 = scmp.ne.s32.totalorder %s74, %s88
    %p90 = scmp.eq.s32.totalorder %s22, 0
    %p91 = por %p89, %p90
    %s93 = sadd.s32 %s92, 1
    %p96 = scmp.eq.s32.totalorder %s16, 1
    %p97 = scmp.ne.s32.totalorder %s92, %s94
    %p98 = scmp.eq.s32.totalorder %s16, 0
    %p99 = por %p97, %p98
    %p100 = scmp.ne.s32.totalorder %s92, %s94
    %p101 = scmp.eq.s32.totalorder %s21, 1
    %p102 = por %p100, %p101
    %p103 = scmp.ne.s32.totalorder %s94, %s95
    %p104 = scmp.eq.s32.totalorder %s21, 0
    %p105 = por %p103, %p104
    %p106 = scmp.ne.s32.totalorder %s94, %s95
    %p107 = scmp.eq.s32.totalorder %s22, 1
    %p108 = por %p106, %p107
    %p110 = scmp.ne.s32.totalorder %s95, %s109
    %p111 = scmp.eq.s32.totalorder %s22, 0
    %p112 = por %p110, %p111
    %s114 = sadd.s32 %s113, 1
    %p117 = scmp.eq.s32.totalorder %s16, 1
    %p118 = scmp.ne.s32.totalorder %s113, %s115
    %p119 = scmp.eq.s32.totalorder %s16, 0
    %p120 = por %p118, %p119
    %p121 = scmp.ne.s32.totalorder %s113, %s115
    %p122 = scmp.eq.s32.totalorder %s21, 1
    %p123 = por %p121, %p122
    %p124 = scmp.ne.s32.totalorder %s115, %s116
    %p125 = scmp.eq.s32.totalorder %s21, 0
    %p126 = por %p124, %p125
    %p127 = scmp.ne.s32.totalorder %s115, %s116
    %p128 = scmp.eq.s32.totalorder %s22, 1
    %p129 = por %p127, %p128
    %p131 = scmp.ne.s32.totalorder %s116, %s130
    %p132 = scmp.eq.s32.totalorder %s22, 0
    %p133 = por %p131, %p132
    %s135 = sadd.s32 %s134, 1
    %p138 = scmp.eq.s32.totalorder %s16, 1
    %p139 = scmp.ne.s32.totalorder %s134, %s136
    %p140 = scmp.eq.s32.totalorder %s16, 0
    %p141 = por %p139, %p140
    %p142 = scmp.ne.s32.totalorder %s134, %s136
    %p143 = scmp.eq.s32.totalorder %s21, 1
    %p144 = por %p142, %p143
    %p145 = scmp.ne.s32.totalorder %s136, %s137
    %p146 = scmp.eq.s32.totalorder %s21, 0
    %p147 = por %p145, %p146
    %p148 = scmp.ne.s32.totalorder %s136, %s137
    %p149 = scmp.eq.s32.totalorder %s22, 1
    %p150 = por %p148, %p149
    %p152 = scmp.ne.s32.totalorder %s137, %s151
    %p153 = scmp.eq.s32.totalorder %s22, 0
    %p154 = por %p152, %p153
    %s156 = sadd.s32 %s155, 1
    %p159 = scmp.eq.s32.totalorder %s16, 1
    %p160 = scmp.ne.s32.totalorder %s155, %s157
    %p161 = scmp.eq.s32.totalorder %s16, 0
    %p162 = por %p160, %p161
    %p163 = scmp.ne.s32.totalorder %s155, %s157
    %p164 = scmp.eq.s32.totalorder %s21, 1
    %p165 = por %p163, %p164
    %p166 = scmp.ne.s32.totalorder %s157, %s158
    %p167 = scmp.eq.s32.totalorder %s21, 0
    %p168 = por %p166, %p167
    %p169 = scmp.ne.s32.totalorder %s157, %s158
    %p170 = scmp.eq.s32.totalorder %s22, 1
    %p171 = por %p169, %p170
    %p173 = scmp.ne.s32.totalorder %s158, %s172
    %p174 = scmp.eq.s32.totalorder %s22, 0
    %p175 = por %p173, %p174
    %s177 = sadd.s32 %s176, 1
    %p180 = scmp.eq.s32.totalorder %s16, 1
    %p181 = scmp.ne.s32.totalorder %s176, %s178
    %p182 = scmp.eq.s32.totalorder %s16, 0
    %p183 = por %p181, %p182
    %p184 = scmp.ne.s32.totalorder %s176, %s178
    %p185 = scmp.eq.s32.totalorder %s21, 1
    %p186 = por %p184, %p185
    %p187 = scmp.ne.s32.totalorder %s178, %s179
    %p188 = scmp.eq.s32.totalorder %s21, 0
    %p189 = por %p187, %p188
    %p190 = scmp.ne.s32.totalorder %s178, %s179
    %p191 = scmp.eq.s32.totalorder %s22, 1
    %p192 = por %p190, %p191
    %p194 = scmp.ne.s32.totalorder %s179, %s193
    %p195 = scmp.eq.s32.totalorder %s22, 0
    %p196 = por %p194, %p195
    %s198 = sadd.s32 %s197, 1
    %p201 = scmp.eq.s32.totalorder %s16, 1
    %p202 = scmp.ne.s32.totalorder %s197, %s199
    %p203 = scmp.eq.s32.totalorder %s16, 0
    %p204 = por %p202, %p203
    %p205 = scmp.ne.s32.totalorder %s197, %s199
    %p206 = scmp.eq.s32.totalorder %s21, 1
    %p207 = por %p205, %p206
    %p208 = scmp.ne.s32.totalorder %s199, %s200
    %p209 = scmp.eq.s32.totalorder %s21, 0
    %p210 = por %p208, %p209
    %p211 = scmp.ne.s32.totalorder %s199, %s200
    %p212 = scmp.eq.s32.totalorder %s22, 1
    %p213 = por %p211, %p212
    %p215 = scmp.ne.s32.totalorder %s200, %s214
    %p216 = scmp.eq.s32.totalorder %s22, 0
    %p217 = por %p215, %p216
    %s219 = sadd.s32 %s218, 1
    %p222 = scmp.eq.s32.totalorder %s16, 1
    %p223 = scmp.ne.s32.totalorder %s218, %s220
    %p224 = scmp.eq.s32.totalorder %s16, 0
    %p225 = por %p223, %p224
    %p226 = scmp.ne.s32.totalorder %s218, %s220
    %p227 = scmp.eq.s32.totalorder %s21, 1
    %p228 = por %p226, %p227
    %p229 = scmp.ne.s32.totalorder %s220, %s221
    %p230 = scmp.eq.s32.totalorder %s21, 0
    %p231 = por %p229, %p230
    %p232 = scmp.ne.s32.totalorder %s220, %s221
    %p233 = scmp.eq.s32.totalorder %s22, 1
    %p234 = por %p232, %p233
    %p236 = scmp.ne.s32.totalorder %s221, %s235
    %p237 = scmp.eq.s32.totalorder %s22, 0
    %p238 = por %p236, %p237
    %s239 = ssub.s32 %s16, %s23
    %p240 = scmp.eq.s32.totalorder %s239, 0
    %s242 = sadd.s32 %s241, 1
    %s243 = scalar_select %p240, %s241, %s242
    %p246 = pneg %p240
    %p247 = scmp.eq.s32.totalorder %s16, 1
    %p248 = por %p246, %p247
    %p249 = scmp.ne.s32.totalorder %s241, %s244
    %p250 = scmp.eq.s32.totalorder %s16, 0
    %p251 = por %p249, %p250
    %p252 = scmp.ne.s32.totalorder %s241, %s244
    %p253 = scmp.eq.s32.totalorder %s21, 1
    %p254 = por %p252, %p253
    %p255 = scmp.ne.s32.totalorder %s244, %s245
    %p256 = scmp.eq.s32.totalorder %s21, 0
    %p257 = por %p255, %p256
    %p258 = scmp.ne.s32.totalorder %s244, %s245
    %p259 = scmp.eq.s32.totalorder %s22, 1
    %p260 = por %p258, %p259
    %p262 = scmp.ne.s32.totalorder %s245, %s261
    %p263 = scmp.eq.s32.totalorder %s22, 0
    %p264 = por %p262, %p263
    %p265 = scmp.le.s32.totalorder 1, %s16
    %p266 = scmp.lt.s32.totalorder %s16, 3
    %p267 = pnand %p265, %p266
    %p268 = pneg %p267
    // Predicated region
    $region9: #{conv_dense_abba_forward.1} parent=5 // pred_check
      _
    $region10: #{conv_dense_abba_forward.1} parent=5 // pred_check_branch
      %270 = sbr.rel (%p267) target = $region12
    $region11: #{conv_dense_abba_forward.1} parent=5 // pred_region
      %s271 = ssub.s32 %s16, 1
      // Predicated region
      $region13: #{conv_dense_abba_forward.1} parent=11 // pred_check
        %p272 = pneg %p37
      $region14: #{conv_dense_abba_forward.1} parent=11 // pred_check_branch
        %274 = sbr.rel (%p272) target = $region16
      $region15: #{conv_dense_abba_forward.1} parent=11 // pred_region
        _
      $region16: #{conv_dense_abba_forward.1} parent=11 // pred_fallthru
        _
      // Predicated region
      $region17: #{conv_dense_abba_forward.1} parent=11 // pred_check
        %p275 = pneg %p84
      $region18: #{conv_dense_abba_forward.1} parent=11 // pred_check_branch
        %277 = sbr.rel (%p275) target = $region20
      $region19: #{conv_dense_abba_forward.1} parent=11 // pred_region
        _
      $region20: #{conv_dense_abba_forward.1} parent=11 // pred_fallthru
        _
      // Predicated region
      $region21: #{conv_dense_abba_forward.1} parent=11 // pred_check
        %p278 = pneg %p105
      $region22: #{conv_dense_abba_forward.1} parent=11 // pred_check_branch
        %280 = sbr.rel (%p278) target = $region24
      $region23: #{conv_dense_abba_forward.1} parent=11 // pred_region
        _
      $region24: #{conv_dense_abba_forward.1} parent=11 // pred_fallthru
        _
      // Predicated region
      $region25: #{conv_dense_abba_forward.1} parent=11 // pred_check
        %p281 = pneg %p126
      $region26: #{conv_dense_abba_forward.1} parent=11 // pred_check_branch
        %283 = sbr.rel (%p281) target = $region28
      $region27: #{conv_dense_abba_forward.1} parent=11 // pred_region
        _
      $region28: #{conv_dense_abba_forward.1} parent=11 // pred_fallthru
        _
      // Predicated region
      $region29: #{conv_dense_abba_forward.1} parent=11 // pred_check
        %p284 = pneg %p147
      $region30: #{conv_dense_abba_forward.1} parent=11 // pred_check_branch
        %286 = sbr.rel (%p284) target = $region32
      $region31: #{conv_dense_abba_forward.1} parent=11 // pred_region
        _
      $region32: #{conv_dense_abba_forward.1} parent=11 // pred_fallthru
        _
      // Predicated region
      $region33: #{conv_dense_abba_forward.1} parent=11 // pred_check
        %p287 = pneg %p168
      $region34: #{conv_dense_abba_forward.1} parent=11 // pred_check_branch
        %289 = sbr.rel (%p287) target = $region36
      $region35: #{conv_dense_abba_forward.1} parent=11 // pred_region
        _
      $region36: #{conv_dense_abba_forward.1} parent=11 // pred_fallthru
        _
      // Predicated region
      $region37: #{conv_dense_abba_forward.1} parent=11 // pred_check
        %p290 = pneg %p189
      $region38: #{conv_dense_abba_forward.1} parent=11 // pred_check_branch
        %292 = sbr.rel (%p290) target = $region40
      $region39: #{conv_dense_abba_forward.1} parent=11 // pred_region
        _
      $region40: #{conv_dense_abba_forward.1} parent=11 // pred_fallthru
        _
      // Predicated region
      $region41: #{conv_dense_abba_forward.1} parent=11 // pred_check
        %p293 = pneg %p210
      $region42: #{conv_dense_abba_forward.1} parent=11 // pred_check_branch
        %295 = sbr.rel (%p293) target = $region44
      $region43: #{conv_dense_abba_forward.1} parent=11 // pred_region
        _
      $region44: #{conv_dense_abba_forward.1} parent=11 // pred_fallthru
        _
      // Predicated region
      $region45: #{conv_dense_abba_forward.1} parent=11 // pred_check
        %p296 = pneg %p231
      $region46: #{conv_dense_abba_forward.1} parent=11 // pred_check_branch
        %298 = sbr.rel (%p296) target = $region48
      $region47: #{conv_dense_abba_forward.1} parent=11 // pred_region
        _
      $region48: #{conv_dense_abba_forward.1} parent=11 // pred_fallthru
        _
    $region12: #{conv_dense_abba_forward.1} parent=5 // pred_fallthru
      _
    %p299 = scmp.lt.s32.totalorder %s16, 2
    // Predicated region
    $region49: #{conv_dense_abba_forward.1} parent=5 // pred_check
      %p300 = pneg %p299
    $region50: #{conv_dense_abba_forward.1} parent=5 // pred_check_branch
      %302 = sbr.rel (%p300) target = $region52
    $region51: #{conv_dense_abba_forward.1} parent=5 // pred_region
      // Predicated region
      $region53: #{conv_dense_abba_forward.1} parent=51 // pred_check
        %p303 = pneg %p57
      $region54: #{conv_dense_abba_forward.1} parent=51 // pred_check_branch
        %305 = sbr.rel (%p303) target = $region56
      $region55: #{conv_dense_abba_forward.1} parent=51 // pred_region
        %s306 = smul.u32 2, %s16
        %p307 = scmp.lt.s32.totalorder %s306, 3
        %s308 = scalar_select %p307, %s306, 3
        %s309 = smul.addr %s308, 8
        %s310 = scalar_lea.vmem %s1, %s309
        %s311 = smul.u32 2, %s16
      $region56: #{conv_dense_abba_forward.1} parent=51 // pred_fallthru
        _
    $region52: #{conv_dense_abba_forward.1} parent=5 // pred_fallthru
      _
    %p312 = scmp.le.s32.totalorder 1, %s16
    %p313 = scmp.lt.s32.totalorder %s16, 3
    %p314 = pnand %p312, %p313
    %p315 = pneg %p314
    // Predicated region
    $region57: #{conv_dense_abba_forward.1} parent=5 // pred_check
      _
    $region58: #{conv_dense_abba_forward.1} parent=5 // pred_check_branch
      %317 = sbr.rel (%p314) target = $region60
    $region59: #{conv_dense_abba_forward.1} parent=5 // pred_region
      %s318 = ssub.s32 %s16, 1
      %p319 = pneg %p37
      %p320 = pneg %p34
      %s321 = smul.u32 2, %s21
      %p322 = scmp.lt.s32.totalorder %s321, 3
      %s323 = scalar_select %p322, %s321, 3
      %s324 = smul.addr %s323, 8
      %s325 = scalar_lea.vmem %s1, %s324
      %p326 = pneg %p63
      %p327 = pneg %p60
      %p328 = pneg %p84
      %p329 = pneg %p81
      %p330 = pneg %p105
      %p331 = pneg %p102
      %p332 = pneg %p126
      %p333 = pneg %p123
      %p334 = pneg %p147
      %p335 = pneg %p144
      %p336 = pneg %p168
      %p337 = pneg %p165
      %p338 = pneg %p189
      %p339 = pneg %p186
      %p340 = pneg %p210
      %p341 = pneg %p207
      %p342 = pneg %p231
      %p343 = pneg %p228
      %p344 = pneg %p257
      %p345 = pneg %p254
      %p346 = scmp.lt.s32.totalorder %s21, 1
      %s347 = scalar_select %p346, %s21, 1
      %s348 = smul.addr %s347, 2
      %s349 = smul.addr %s348, 8
      %s350 = scalar_lea.vmem %s10, %s349
      %s351 = smul.u32 2, %s21
      %p352 = scmp.lt.s32.totalorder %s351, 3
      %s353 = scalar_select %p352, %s351, 3
      %s354 = smul.addr %s353, 8
      %s355 = scalar_lea.vmem %s1, %s354
      %s356 = smul.u32 2, %s21
      %p357 = scmp.lt.s32.totalorder %s21, 1
      %s358 = scalar_select %p357, %s21, 1
      %s359 = smul.addr %s358, 2
      %s360 = smul.addr %s359, 8
      %s361 = scalar_lea.vmem %s10, %s360
      %v362 = vld [vmem:[%s355] sm:$0xff]
      %v363 = vld [vmem:[%s355 + $0x8] sm:$0xff]
      %364 = vrot.lane.b32.xlu0 %v362, 17
      %v365 = vpop.permute.xlu0 %364
      %366 = vrot.lane.b32.xlu0 %v363, 17
      %v367 = vpop.permute.xlu0 %366
      %v368 = vlaneseq
      %v369 = vand.u32 %v368, 127
      %vm370 = vcmp.lt.s32.totalorder %v369, 17
      %v371 = vsel %vm370, %v365, %v367
      %v372 = vsel %vm370, %v367, %v365
      %v373 = vld [vmem:[%s0] ss:$8 sm:$0x3]
      %v375 = vlaneseq
      %v376 = vshrl.u32 %v375, 7
      %v377 = vsub.s32 0, %v376
      %v378 = vrot.slane %v373, %v377
      %v379 = vlaneseq
      %v380 = vshrl.u32 %v379, 7
      %v381 = vsub.s32 1, %v380
      %v382 = vrot.slane %v373, %v381
      %v385 = vmul.f32 %v372, %v378
      %v386 = vmul.f32 %v371, %v382
      %387 = vst [vmem:[#allocation2] sm:$0xff] %v385
      %388 = vst [vmem:[#allocation2 + $0x8] sm:$0xff] %v386
      %389 = vrot.lane.b32.xlu0 %v362, 16
      %v390 = vpop.permute.xlu0 %389
      %391 = vrot.lane.b32.xlu0 %v363, 16
      %v392 = vpop.permute.xlu0 %391
      %vm393 = vcmp.lt.s32.totalorder %v369, 16
      %v394 = vsel %vm393, %v390, %v392
      %v395 = vsel %vm393, %v392, %v390
      %s396 = scalar_lea.vmem %s0, 1
      %v397 = vld [vmem:[%s396] ss:$8 sm:$0x3]
      %v399 = vlaneseq
      %v400 = vshrl.u32 %v399, 7
      %v401 = vsub.s32 0, %v400
      %v402 = vrot.slane %v397, %v401
      %v403 = vlaneseq
      %v404 = vshrl.u32 %v403, 7
      %v405 = vsub.s32 1, %v404
      %v406 = vrot.slane %v397, %v405
      %v409 = vmul.f32 %v395, %v402
      %v410 = vmul.f32 %v394, %v406
      %411 = vst [vmem:[#allocation2 + $0x10] sm:$0xff] %v409
      %412 = vst [vmem:[#allocation2 + $0x18] sm:$0xff] %v410
      %413 = vrot.lane.b32.xlu0 %v362, 15
      %v414 = vpop.permute.xlu0 %413
      %415 = vrot.lane.b32.xlu0 %v363, 15
      %v416 = vpop.permute.xlu0 %415
      %vm417 = vcmp.lt.s32.totalorder %v369, 15
      %v418 = vsel %vm417, %v414, %v416
      %v419 = vsel %vm417, %v416, %v414
      %s420 = scalar_lea.vmem %s0, 2
      %v421 = vld [vmem:[%s420] ss:$8 sm:$0x3]
      %v423 = vlaneseq
      %v424 = vshrl.u32 %v423, 7
      %v425 = vsub.s32 0, %v424
      %v426 = vrot.slane %v421, %v425
      %v427 = vlaneseq
      %v428 = vshrl.u32 %v427, 7
      %v429 = vsub.s32 1, %v428
      %v430 = vrot.slane %v421, %v429
      %v433 = vmul.f32 %v419, %v426
      %v434 = vmul.f32 %v418, %v430
      %435 = vst [vmem:[#allocation2 + $0x20] sm:$0xff] %v433
      %436 = vst [vmem:[#allocation2 + $0x28] sm:$0xff] %v434
      %437 = vrot.lane.b32.xlu0 %v362, 1
      %v438 = vpop.permute.xlu0 %437
      %439 = vrot.lane.b32.xlu0 %v363, 1
      %v440 = vpop.permute.xlu0 %439
      %vm441 = vcmp.lt.s32.totalorder %v369, 1
      %v442 = vsel %vm441, %v438, %v440
      %v443 = vsel %vm441, %v440, %v438
      %s444 = scalar_lea.vmem %s0, 3
      %v445 = vld [vmem:[%s444] ss:$8 sm:$0x3]
      %v447 = vlaneseq
      %v448 = vshrl.u32 %v447, 7
      %v449 = vsub.s32 0, %v448
      %v450 = vrot.slane %v445, %v449
      %v451 = vlaneseq
      %v452 = vshrl.u32 %v451, 7
      %v453 = vsub.s32 1, %v452
      %v454 = vrot.slane %v445, %v453
      %v457 = vmul.f32 %v443, %v450
      %v458 = vmul.f32 %v442, %v454
      %459 = vst [vmem:[#allocation2 + $0x30] sm:$0xff] %v457
      %460 = vst [vmem:[#allocation2 + $0x38] sm:$0xff] %v458
      %461 = vst [vmem:[#allocation2 + $0x40] sm:$0xff] %v362
      %462 = vst [vmem:[#allocation2 + $0x48] sm:$0xff] %v363
      %463 = vrot.lane.b32.xlu0 %v362, 127
      %v464 = vpop.permute.xlu0 %463
      %465 = vrot.lane.b32.xlu0 %v363, 127
      %v466 = vpop.permute.xlu0 %465
      %vm467 = vcmp.lt.s32.totalorder %v369, 127
      %v468 = vsel %vm467, %v464, %v466
      %v469 = vsel %vm467, %v466, %v464
      %s470 = scalar_lea.vmem %s0, 5
      %v471 = vld [vmem:[%s470] ss:$8 sm:$0x3]
      %v473 = vlaneseq
      %v474 = vshrl.u32 %v473, 7
      %v475 = vsub.s32 0, %v474
      %v476 = vrot.slane %v471, %v475
      %v477 = vlaneseq
      %v478 = vshrl.u32 %v477, 7
      %v479 = vsub.s32 1, %v478
      %v480 = vrot.slane %v471, %v479
      %v483 = vmul.f32 %v468, %v476
      %v484 = vmul.f32 %v469, %v480
      %485 = vst [vmem:[#allocation2 + $0x50] sm:$0xff] %v483
      %486 = vst [vmem:[#allocation2 + $0x58] sm:$0xff] %v484
      %487 = vrot.lane.b32.xlu0 %v362, 113
      %v488 = vpop.permute.xlu0 %487
      %489 = vrot.lane.b32.xlu0 %v363, 113
      %v490 = vpop.permute.xlu0 %489
      %vm491 = vcmp.lt.s32.totalorder %v369, 113
      %v492 = vsel %vm491, %v488, %v490
      %v493 = vsel %vm491, %v490, %v488
      %s494 = scalar_lea.vmem %s0, 6
      %v495 = vld [vmem:[%s494] ss:$8 sm:$0x3]
      %v497 = vlaneseq
      %v498 = vshrl.u32 %v497, 7
      %v499 = vsub.s32 0, %v498
      %v500 = vrot.slane %v495, %v499
      %v501 = vlaneseq
      %v502 = vshrl.u32 %v501, 7
      %v503 = vsub.s32 1, %v502
      %v504 = vrot.slane %v495, %v503
      %v507 = vmul.f32 %v492, %v500
      %v508 = vmul.f32 %v493, %v504
      %509 = vst [vmem:[#allocation2 + $0x60] sm:$0xff] %v507
      %510 = vst [vmem:[#allocation2 + $0x68] sm:$0xff] %v508
      %511 = vrot.lane.b32.xlu0 %v362, 112
      %v512 = vpop.permute.xlu0 %511
      %513 = vrot.lane.b32.xlu0 %v363, 112
      %v514 = vpop.permute.xlu0 %513
      %vm515 = vcmp.lt.s32.totalorder %v369, 112
      %v516 = vsel %vm515, %v512, %v514
      %v517 = vsel %vm515, %v514, %v512
      %s518 = scalar_lea.vmem %s0, 7
      %v519 = vld [vmem:[%s518] ss:$8 sm:$0x3]
      %v521 = vlaneseq
      %v522 = vshrl.u32 %v521, 7
      %v523 = vsub.s32 0, %v522
      %v524 = vrot.slane %v519, %v523
      %v525 = vlaneseq
      %v526 = vshrl.u32 %v525, 7
      %v527 = vsub.s32 1, %v526
      %v528 = vrot.slane %v519, %v527
      %v531 = vmul.f32 %v516, %v524
      %v532 = vmul.f32 %v517, %v528
      %533 = vst [vmem:[#allocation2 + $0x70] sm:$0xff] %v531
      %534 = vst [vmem:[#allocation2 + $0x78] sm:$0xff] %v532
      %535 = vrot.lane.b32.xlu0 %v362, 111
      %v536 = vpop.permute.xlu0 %535
      %537 = vrot.lane.b32.xlu0 %v363, 111
      %v538 = vpop.permute.xlu0 %537
      %vm539 = vcmp.lt.s32.totalorder %v369, 111
      %v540 = vsel %vm539, %v536, %v538
      %v541 = vsel %vm539, %v538, %v536
      %s542 = scalar_lea.vmem %s0, 16
      %v543 = vld [vmem:[%s542] ss:$8 sm:$0x3]
      %v545 = vlaneseq
      %v546 = vshrl.u32 %v545, 7
      %v547 = vsub.s32 0, %v546
      %v548 = vrot.slane %v543, %v547
      %v549 = vlaneseq
      %v550 = vshrl.u32 %v549, 7
      %v551 = vsub.s32 1, %v550
      %v552 = vrot.slane %v543, %v551
      %v555 = vmul.f32 %v540, %v548
      %v556 = vmul.f32 %v541, %v552
      %557 = vst [vmem:[#allocation2 + $0x80] sm:$0xff] %v555
      %558 = vst [vmem:[#allocation2 + $0x88] sm:$0xff] %v556
      %v559 = vld [vmem:[%s2] sm:$0xff]
      %v560 = vld [vmem:[#allocation2] sm:$0xff]
      %v561 = vld [vmem:[#allocation2 + $0x8] sm:$0xff]
      %v562 = vld [vmem:[#allocation2 + $0x10] sm:$0xff]
      %v563 = vld [vmem:[#allocation2 + $0x18] sm:$0xff]
      %v564 = vld [vmem:[#allocation2 + $0x20] sm:$0xff]
      %v565 = vld [vmem:[#allocation2 + $0x28] sm:$0xff]
      %v566 = vld [vmem:[#allocation2 + $0x30] sm:$0xff]
      %v567 = vld [vmem:[#allocation2 + $0x38] sm:$0xff]
      %v568 = vld [vmem:[#allocation2 + $0x40] sm:$0xff]
      %v569 = vld [vmem:[#allocation2 + $0x48] sm:$0xff]
      %v570 = vld [vmem:[#allocation2 + $0x50] sm:$0xff]
      %v571 = vld [vmem:[#allocation2 + $0x58] sm:$0xff]
      %v572 = vld [vmem:[#allocation2 + $0x60] sm:$0xff]
      %v573 = vld [vmem:[#allocation2 + $0x68] sm:$0xff]
      %v574 = vld [vmem:[#allocation2 + $0x70] sm:$0xff]
      %v575 = vld [vmem:[#allocation2 + $0x78] sm:$0xff]
      %v576 = vld [vmem:[#allocation2 + $0x80] sm:$0xff]
      %v577 = vld [vmem:[#allocation2 + $0x88] sm:$0xff]
      %v578 = vld [vmem:[%s3] sm:$0xff]
      %580 = vset.pattern.permute.xlu0 0
      %581 = vperm.xlu0 %580, %v578
      %v582 = vpop.permute.xlu0 %581
      %vm584 = vcmask 588800
      %v586 = vsel %vm584, %v559, 0
      %588 = vmatprep.subr.mxu0 %v561
      %589 = vmatpush1.msra.mxu0 %v560
      %590 = vmatprep.subr.mxu0 %v563
      %591 = vmatpush1.msra.mxu0 %v562
      %592 = vmatprep.subr.mxu0 %v565
      %593 = vmatpush1.msra.mxu0 %v564
      %594 = vmatprep.subr.mxu0 %v567
      %595 = vmatpush1.msra.mxu0 %v566
      %596 = vmatprep.subr.mxu0 %v569
      %597 = vmatpush1.msra.mxu0 %v568
      %598 = vmatprep.subr.mxu0 %v571
      %599 = vmatpush1.msra.mxu0 %v570
      %600 = vmatprep.subr.mxu0 %v573
      %601 = vmatpush1.msra.mxu0 %v572
      %602 = vmatprep.subr.mxu0 %v575
      %603 = vmatpush1.msra.mxu0 %v574
      %604 = vmatprep.subr.mxu0 %v577
      %605 = vmatpush1.msra.mxu0 %v576
      %606 = vmatprep.subr.mxu0 0.0
      %607 = vmatpush1.msra.mxu0 0.0
      %608 = vmatprep.subr.mxu0 0.0
      %609 = vmatpush1.msra.mxu0 0.0
      %610 = vmatprep.subr.mxu0 0.0
      %611 = vmatpush1.msra.mxu0 0.0
      %612 = vmatprep.subr.mxu0 0.0
      %613 = vmatpush1.msra.mxu0 0.0
      %614 = vmatprep.subr.mxu0 0.0
      %615 = vmatpush1.msra.mxu0 0.0
      %616 = vmatprep.subr.mxu0 0.0
      %617 = vmatpush1.msra.mxu0 0.0
      %618 = vmatprep.subr.mxu0 0.0
      %619 = vmatpush1.msra.mxu0 0.0
      %620 = vmatprep.subr.mxu0 0.0
      %621 = vmatpush1.msra.mxu0 0.0
      %622 = vmatprep.subr.mxu0 0.0
      %623 = vmatpush1.msra.mxu0 0.0
      %624 = vmatprep.subr.mxu0 0.0
      %625 = vmatpush1.msra.mxu0 0.0
      %626 = vmatprep.subr.mxu0 0.0
      %627 = vmatpush1.msra.mxu0 0.0
      %628 = vmatprep.subr.mxu0 0.0
      %629 = vmatpush1.msra.mxu0 0.0
      %630 = vmatprep.subr.mxu0 0.0
      %631 = vmatpush1.msra.mxu0 0.0
      %632 = vmatprep.subr.mxu0 0.0
      %633 = vmatpush1.msra.mxu0 0.0
      %634 = vmatprep.subr.mxu0 0.0
      %635 = vmatpush1.msra.mxu0 0.0
      %636 = vmatprep.subr.mxu0 0.0
      %637 = vmatpush1.msra.mxu0 0.0
      %638 = vmatprep.subr.mxu0 0.0
      %639 = vmatpush1.msra.mxu0 0.0
      %640 = vmatprep.subr.mxu0 0.0
      %641 = vmatpush1.msra.mxu0 0.0
      %642 = vmatprep.subr.mxu0 0.0
      %643 = vmatpush1.msra.mxu0 0.0
      %644 = vmatprep.subr.mxu0 0.0
      %645 = vmatpush1.msra.mxu0 0.0
      %646 = vmatprep.subr.mxu0 0.0
      %647 = vmatpush1.msra.mxu0 0.0
      %648 = vmatprep.subr.mxu0 0.0
      %649 = vmatpush1.msra.mxu0 0.0
      %650 = vmatprep.subr.mxu0 0.0
      %651 = vmatpush1.msra.mxu0 0.0
      %652 = vmatprep.mubr.f32.mxu0 0.0
      %653 = vmatmul.mubr.f32.gmra.mrb[0].mxu0 %v586
      %v654 = vpop.f32.mrb[0].mxu0
      %v655 = vadd.f32 %v582, %v654
      %v656 = vpop.f32.mrb[0].mxu0
      %v657 = vadd.f32 %v582, %v656
      %658 = vdwg.mxu0
      %v659 = vmax.f32 %v655, -5.0
      %v660 = vmax.f32 %v657, -5.0
      %v661 = vmin.f32 %v659, 5.0
      %v662 = vmin.f32 %v660, 5.0
      %v663 = vsub.f32 %v655, %v661
      %v664 = vsub.f32 %v657, %v662
      %v665 = vmul.f32 %v663, 0.01
      %v666 = vmul.f32 %v664, 0.01
      %v667 = vadd.f32 %v661, %v665
      %v668 = vadd.f32 %v662, %v666
      %669 = vrot.lane.b32.xlu0 %v667, 17
      %v670 = vpop.permute.xlu0 %669
      %671 = vrot.lane.b32.xlu0 %v668, 17
      %v672 = vpop.permute.xlu0 %671
      %v673 = vsel %vm370, %v670, %v672
      %v674 = vsel %vm370, %v672, %v670
      %v675 = vld [vmem:[%s0] ss:$8 sm:$0x3]
      %v677 = vlaneseq
      %v678 = vshrl.u32 %v677, 7
      %v679 = vsub.s32 0, %v678
      %v680 = vrot.slane %v675, %v679
      %v681 = vlaneseq
      %v682 = vshrl.u32 %v681, 7
      %v683 = vsub.s32 1, %v682
      %v684 = vrot.slane %v675, %v683
      %v687 = vmul.f32 %v674, %v680
      %v688 = vmul.f32 %v673, %v684
      %689 = vst [vmem:[#allocation2] sm:$0xff] %v687
      %690 = vst [vmem:[#allocation2 + $0x8] sm:$0xff] %v688
      %691 = vrot.lane.b32.xlu0 %v667, 16
      %v692 = vpop.permute.xlu0 %691
      %693 = vrot.lane.b32.xlu0 %v668, 16
      %v694 = vpop.permute.xlu0 %693
      %v695 = vsel %vm393, %v692, %v694
      %v696 = vsel %vm393, %v694, %v692
      %v697 = vld [vmem:[%s396] ss:$8 sm:$0x3]
      %v699 = vlaneseq
      %v700 = vshrl.u32 %v699, 7
      %v701 = vsub.s32 0, %v700
      %v702 = vrot.slane %v697, %v701
      %v703 = vlaneseq
      %v704 = vshrl.u32 %v703, 7
      %v705 = vsub.s32 1, %v704
      %v706 = vrot.slane %v697, %v705
      %v709 = vmul.f32 %v696, %v702
      %v710 = vmul.f32 %v695, %v706
      %711 = vst [vmem:[#allocation2 + $0x10] sm:$0xff] %v709
      %712 = vst [vmem:[#allocation2 + $0x18] sm:$0xff] %v710
      %713 = vrot.lane.b32.xlu0 %v667, 15
      %v714 = vpop.permute.xlu0 %713
      %715 = vrot.lane.b32.xlu0 %v668, 15
      %v716 = vpop.permute.xlu0 %715
      %v717 = vsel %vm417, %v714, %v716
      %v718 = vsel %vm417, %v716, %v714
      %v719 = vld [vmem:[%s420] ss:$8 sm:$0x3]
      %v721 = vlaneseq
      %v722 = vshrl.u32 %v721, 7
      %v723 = vsub.s32 0, %v722
      %v724 = vrot.slane %v719, %v723
      %v725 = vlaneseq
      %v726 = vshrl.u32 %v725, 7
      %v727 = vsub.s32 1, %v726
      %v728 = vrot.slane %v719, %v727
      %v731 = vmul.f32 %v718, %v724
      %v732 = vmul.f32 %v717, %v728
      %733 = vst [vmem:[#allocation2 + $0x20] sm:$0xff] %v731
      %734 = vst [vmem:[#allocation2 + $0x28] sm:$0xff] %v732
      %735 = vrot.lane.b32.xlu0 %v667, 1
      %v736 = vpop.permute.xlu0 %735
      %737 = vrot.lane.b32.xlu0 %v668, 1
      %v738 = vpop.permute.xlu0 %737
      %v739 = vsel %vm441, %v736, %v738
      %v740 = vsel %vm441, %v738, %v736
      %v741 = vld [vmem:[%s444] ss:$8 sm:$0x3]
      %v743 = vlaneseq
      %v744 = vshrl.u32 %v743, 7
      %v745 = vsub.s32 0, %v744
      %v746 = vrot.slane %v741, %v745
      %v747 = vlaneseq
      %v748 = vshrl.u32 %v747, 7
      %v749 = vsub.s32 1, %v748
      %v750 = vrot.slane %v741, %v749
      %v753 = vmul.f32 %v740, %v746
      %v754 = vmul.f32 %v739, %v750
      %755 = vst [vmem:[#allocation2 + $0x30] sm:$0xff] %v753
      %756 = vst [vmem:[#allocation2 + $0x38] sm:$0xff] %v754
      %757 = vst [vmem:[#allocation2 + $0x40] sm:$0xff] %v667
      %758 = vst [vmem:[#allocation2 + $0x48] sm:$0xff] %v668
      %759 = vrot.lane.b32.xlu0 %v667, 127
      %v760 = vpop.permute.xlu0 %759
      %761 = vrot.lane.b32.xlu0 %v668, 127
      %v762 = vpop.permute.xlu0 %761
      %v763 = vsel %vm467, %v760, %v762
      %v764 = vsel %vm467, %v762, %v760
      %v765 = vld [vmem:[%s470] ss:$8 sm:$0x3]
      %v767 = vlaneseq
      %v768 = vshrl.u32 %v767, 7
      %v769 = vsub.s32 0, %v768
      %v770 = vrot.slane %v765, %v769
      %v771 = vlaneseq
      %v772 = vshrl.u32 %v771, 7
      %v773 = vsub.s32 1, %v772
      %v774 = vrot.slane %v765, %v773
      %v777 = vmul.f32 %v763, %v770
      %v778 = vmul.f32 %v764, %v774
      %779 = vst [vmem:[#allocation2 + $0x50] sm:$0xff] %v777
      %780 = vst [vmem:[#allocation2 + $0x58] sm:$0xff] %v778
      %781 = vrot.lane.b32.xlu0 %v667, 113
      %v782 = vpop.permute.xlu0 %781
      %783 = vrot.lane.b32.xlu0 %v668, 113
      %v784 = vpop.permute.xlu0 %783
      %v785 = vsel %vm491, %v782, %v784
      %v786 = vsel %vm491, %v784, %v782
      %v787 = vld [vmem:[%s494] ss:$8 sm:$0x3]
      %v789 = vlaneseq
      %v790 = vshrl.u32 %v789, 7
      %v791 = vsub.s32 0, %v790
      %v792 = vrot.slane %v787, %v791
      %v793 = vlaneseq
      %v794 = vshrl.u32 %v793, 7
      %v795 = vsub.s32 1, %v794
      %v796 = vrot.slane %v787, %v795
      %v799 = vmul.f32 %v785, %v792
      %v800 = vmul.f32 %v786, %v796
      %801 = vst [vmem:[#allocation2 + $0x60] sm:$0xff] %v799
      %802 = vst [vmem:[#allocation2 + $0x68] sm:$0xff] %v800
      %803 = vrot.lane.b32.xlu0 %v667, 112
      %v804 = vpop.permute.xlu0 %803
      %805 = vrot.lane.b32.xlu0 %v668, 112
      %v806 = vpop.permute.xlu0 %805
      %v807 = vsel %vm515, %v804, %v806
      %v808 = vsel %vm515, %v806, %v804
      %v809 = vld [vmem:[%s518] ss:$8 sm:$0x3]
      %v811 = vlaneseq
      %v812 = vshrl.u32 %v811, 7
      %v813 = vsub.s32 0, %v812
      %v814 = vrot.slane %v809, %v813
      %v815 = vlaneseq
      %v816 = vshrl.u32 %v815, 7
      %v817 = vsub.s32 1, %v816
      %v818 = vrot.slane %v809, %v817
      %v821 = vmul.f32 %v807, %v814
      %v822 = vmul.f32 %v808, %v818
      %823 = vst [vmem:[#allocation2 + $0x70] sm:$0xff] %v821
      %824 = vst [vmem:[#allocation2 + $0x78] sm:$0xff] %v822
      %825 = vrot.lane.b32.xlu0 %v667, 111
      %v826 = vpop.permute.xlu0 %825
      %827 = vrot.lane.b32.xlu0 %v668, 111
      %v828 = vpop.permute.xlu0 %827
      %v829 = vsel %vm539, %v826, %v828
      %v830 = vsel %vm539, %v828, %v826
      %v831 = vld [vmem:[%s542] ss:$8 sm:$0x3]
      %v833 = vlaneseq
      %v834 = vshrl.u32 %v833, 7
      %v835 = vsub.s32 0, %v834
      %v836 = vrot.slane %v831, %v835
      %v837 = vlaneseq
      %v838 = vshrl.u32 %v837, 7
      %v839 = vsub.s32 1, %v838
      %v840 = vrot.slane %v831, %v839
      %v843 = vmul.f32 %v829, %v836
      %v844 = vmul.f32 %v830, %v840
      %845 = vst [vmem:[#allocation2 + $0x80] sm:$0xff] %v843
      %846 = vst [vmem:[#allocation2 + $0x88] sm:$0xff] %v844
      %v847 = vld [vmem:[%s4] sm:$0xff]
      %v848 = vld [vmem:[%s4 + $0x8] sm:$0xff]
      %v849 = vld [vmem:[#allocation2] sm:$0xff]
      %v850 = vld [vmem:[#allocation2 + $0x8] sm:$0xff]
      %v851 = vld [vmem:[#allocation2 + $0x10] sm:$0xff]
      %v852 = vld [vmem:[#allocation2 + $0x18] sm:$0xff]
      %v853 = vld [vmem:[#allocation2 + $0x20] sm:$0xff]
      %v854 = vld [vmem:[#allocation2 + $0x28] sm:$0xff]
      %v855 = vld [vmem:[#allocation2 + $0x30] sm:$0xff]
      %v856 = vld [vmem:[#allocation2 + $0x38] sm:$0xff]
      %v857 = vld [vmem:[#allocation2 + $0x40] sm:$0xff]
      %v858 = vld [vmem:[#allocation2 + $0x48] sm:$0xff]
      %v859 = vld [vmem:[#allocation2 + $0x50] sm:$0xff]
      %v860 = vld [vmem:[#allocation2 + $0x58] sm:$0xff]
      %v861 = vld [vmem:[#allocation2 + $0x60] sm:$0xff]
      %v862 = vld [vmem:[#allocation2 + $0x68] sm:$0xff]
      %v863 = vld [vmem:[#allocation2 + $0x70] sm:$0xff]
      %v864 = vld [vmem:[#allocation2 + $0x78] sm:$0xff]
      %v865 = vld [vmem:[#allocation2 + $0x80] sm:$0xff]
      %v866 = vld [vmem:[#allocation2 + $0x88] sm:$0xff]
      %v867 = vld [vmem:[%s5] sm:$0xff]
      %v868 = vld [vmem:[%s5 + $0x8] sm:$0xff]
      %870 = vset.pattern.permute.xlu0 0
      %871 = vperm.xlu0 %870, %v867
      %v872 = vpop.permute.xlu0 %871
      %875 = vset.pattern.permute.xlu0 0
      %876 = vperm.xlu0 %875, %v868
      %v877 = vpop.permute.xlu0 %876
      %v880 = vsel %vm584, %v847, 0
      %v883 = vsel %vm584, %v848, 0
      %885 = vmatprep.subr.mxu0 %v850
      %886 = vmatpush1.msra.mxu0 %v849
      %887 = vmatprep.subr.mxu0 %v852
      %888 = vmatpush1.msra.mxu0 %v851
      %889 = vmatprep.subr.mxu0 %v854
      %890 = vmatpush1.msra.mxu0 %v853
      %891 = vmatprep.subr.mxu0 %v856
      %892 = vmatpush1.msra.mxu0 %v855
      %893 = vmatprep.subr.mxu0 %v858
      %894 = vmatpush1.msra.mxu0 %v857
      %895 = vmatprep.subr.mxu0 %v860
      %896 = vmatpush1.msra.mxu0 %v859
      %897 = vmatprep.subr.mxu0 %v862
      %898 = vmatpush1.msra.mxu0 %v861
      %899 = vmatprep.subr.mxu0 %v864
      %900 = vmatpush1.msra.mxu0 %v863
      %901 = vmatprep.subr.mxu0 %v866
      %902 = vmatpush1.msra.mxu0 %v865
      %903 = vmatprep.subr.mxu0 0.0
      %904 = vmatpush1.msra.mxu0 0.0
      %905 = vmatprep.subr.mxu0 0.0
      %906 = vmatpush1.msra.mxu0 0.0
      %907 = vmatprep.subr.mxu0 0.0
      %908 = vmatpush1.msra.mxu0 0.0
      %909 = vmatprep.subr.mxu0 0.0
      %910 = vmatpush1.msra.mxu0 0.0
      %911 = vmatprep.subr.mxu0 0.0
      %912 = vmatpush1.msra.mxu0 0.0
      %913 = vmatprep.subr.mxu0 0.0
      %914 = vmatpush1.msra.mxu0 0.0
      %915 = vmatprep.subr.mxu0 0.0
      %916 = vmatpush1.msra.mxu0 0.0
      %917 = vmatprep.subr.mxu0 0.0
      %918 = vmatpush1.msra.mxu0 0.0
      %919 = vmatprep.subr.mxu0 0.0
      %920 = vmatpush1.msra.mxu0 0.0
      %921 = vmatprep.subr.mxu0 0.0
      %922 = vmatpush1.msra.mxu0 0.0
      %923 = vmatprep.subr.mxu0 0.0
      %924 = vmatpush1.msra.mxu0 0.0
      %925 = vmatprep.subr.mxu0 0.0
      %926 = vmatpush1.msra.mxu0 0.0
      %927 = vmatprep.subr.mxu0 0.0
      %928 = vmatpush1.msra.mxu0 0.0
      %929 = vmatprep.subr.mxu0 0.0
      %930 = vmatpush1.msra.mxu0 0.0
      %931 = vmatprep.subr.mxu0 0.0
      %932 = vmatpush1.msra.mxu0 0.0
      %933 = vmatprep.subr.mxu0 0.0
      %934 = vmatpush1.msra.mxu0 0.0
      %935 = vmatprep.subr.mxu0 0.0
      %936 = vmatpush1.msra.mxu0 0.0
      %937 = vmatprep.subr.mxu0 0.0
      %938 = vmatpush1.msra.mxu0 0.0
      %939 = vmatprep.subr.mxu0 0.0
      %940 = vmatpush1.msra.mxu0 0.0
      %941 = vmatprep.subr.mxu0 0.0
      %942 = vmatpush1.msra.mxu0 0.0
      %943 = vmatprep.subr.mxu0 0.0
      %944 = vmatpush1.msra.mxu0 0.0
      %945 = vmatprep.subr.mxu0 0.0
      %946 = vmatpush1.msra.mxu0 0.0
      %947 = vmatprep.subr.mxu0 0.0
      %948 = vmatpush1.msra.mxu0 0.0
      %949 = vmatprep.mubr.f32.mxu0 0.0
      %950 = vmatmul.mubr.f32.gmra.mrb[0].mxu0 %v880
      %v951 = vpop.f32.mrb[0].mxu0
      %v952 = vadd.f32 %v872, %v951
      %v953 = vpop.f32.mrb[0].mxu0
      %v954 = vadd.f32 %v872, %v953
      %955 = vmatprep.mubr.f32.mxu0 0.0
      %956 = vmatmul.mubr.f32.gmra.mrb[0].mxu0 %v883
      %v957 = vpop.f32.mrb[0].mxu0
      %v958 = vadd.f32 %v877, %v957
      %v959 = vpop.f32.mrb[0].mxu0
      %v960 = vadd.f32 %v877, %v959
      %961 = vdwg.mxu0
      %v962 = vmax.f32 %v952, -5.0
      %v963 = vmax.f32 %v954, -5.0
      %v964 = vmax.f32 %v958, -5.0
      %v965 = vmax.f32 %v960, -5.0
      %v966 = vmin.f32 %v962, 5.0
      %v967 = vmin.f32 %v963, 5.0
      %v968 = vmin.f32 %v964, 5.0
      %v969 = vmin.f32 %v965, 5.0
      %v970 = vsub.f32 %v952, %v966
      %v971 = vsub.f32 %v954, %v967
      %v972 = vsub.f32 %v958, %v968
      %v973 = vsub.f32 %v960, %v969
      %v974 = vmul.f32 %v970, 0.01
      %v975 = vmul.f32 %v971, 0.01
      %v976 = vmul.f32 %v972, 0.01
      %v977 = vmul.f32 %v973, 0.01
      %v978 = vadd.f32 %v966, %v974
      %v979 = vadd.f32 %v967, %v975
      %v980 = vadd.f32 %v968, %v976
      %v981 = vadd.f32 %v969, %v977
      %v982 = vmax.f32 %v978, %v979
      %983 = vmax.xlane.f32.xlu0 %v982
      %v984 = vpop.xlane.xlu0 %983
      %v985 = vmax.f32 %v980, %v981
      %986 = vmax.xlane.f32.xlu0 %v985
      %v987 = vpop.xlane.xlu0 %986
      %vm988 = vcmask 7168
      %989 = vst.msk [vmem:[#allocation3] sm:$0xff] %vm988, %v984
      %990 = vst.msk [vmem:[#allocation3 + $0x8] sm:$0xff] %vm988, %v987
      %v991 = vld [vmem:[#allocation3] sm:$0xff]
      %v992 = vld [vmem:[#allocation3 + $0x8] sm:$0xff]
      %v993 = vld [vmem:[%s6] sm:$0xff]
      %v994 = vld [vmem:[%s6 + $0x8] sm:$0xff]
      %v995 = vld [vmem:[%s6 + $0x10] sm:$0xff]
      %v996 = vld [vmem:[%s6 + $0x18] sm:$0xff]
      %v997 = vld [vmem:[%s7] sm:$0xff]
      %v998 = vld [vmem:[%s7 + $0x8] sm:$0xff]
      %v999 = vld [vmem:[%s7 + $0x10] sm:$0xff]
      %v1000 = vld [vmem:[%s7 + $0x18] sm:$0xff]
      %vm1001 = vcmask 130048
      %v1003 = vsel %vm1001, %v993, 0
      %v1006 = vsel %vm1001, %v994, 0
      %v1009 = vsel %vm1001, %v995, 0
      %v1012 = vsel %vm1001, %v996, 0
      %1014 = vmatprep.subr.mxu0 0.0
      %1015 = vmatpush1.msra.mxu0 %v991
      %1016 = vmatprep.subr.mxu0 0.0
      %1017 = vmatpush1.msra.mxu0 %v992
      %1018 = vmatprep.subr.mxu0 0.0
      %1019 = vmatpush1.msra.mxu0 0.0
      %1020 = vmatprep.subr.mxu0 0.0
      %1021 = vmatpush1.msra.mxu0 0.0
      %1022 = vmatprep.subr.mxu0 0.0
      %1023 = vmatpush1.msra.mxu0 0.0
      %1024 = vmatprep.subr.mxu0 0.0
      %1025 = vmatpush1.msra.mxu0 0.0
      %1026 = vmatprep.subr.mxu0 0.0
      %1027 = vmatpush1.msra.mxu0 0.0
      %1028 = vmatprep.subr.mxu0 0.0
      %1029 = vmatpush1.msra.mxu0 0.0
      %1030 = vmatprep.subr.mxu0 0.0
      %1031 = vmatpush1.msra.mxu0 0.0
      %1032 = vmatprep.subr.mxu0 0.0
      %1033 = vmatpush1.msra.mxu0 0.0
      %1034 = vmatprep.subr.mxu0 0.0
      %1035 = vmatpush1.msra.mxu0 0.0
      %1036 = vmatprep.subr.mxu0 0.0
      %1037 = vmatpush1.msra.mxu0 0.0
      %1038 = vmatprep.subr.mxu0 0.0
      %1039 = vmatpush1.msra.mxu0 0.0
      %1040 = vmatprep.subr.mxu0 0.0
      %1041 = vmatpush1.msra.mxu0 0.0
      %1042 = vmatprep.subr.mxu0 0.0
      %1043 = vmatpush1.msra.mxu0 0.0
      %1044 = vmatprep.subr.mxu0 0.0
      %1045 = vmatpush1.msra.mxu0 0.0
      %1046 = vmatprep.subr.mxu0 0.0
      %1047 = vmatpush1.msra.mxu0 0.0
      %1048 = vmatprep.subr.mxu0 0.0
      %1049 = vmatpush1.msra.mxu0 0.0
      %1050 = vmatprep.subr.mxu0 0.0
      %1051 = vmatpush1.msra.mxu0 0.0
      %1052 = vmatprep.subr.mxu0 0.0
      %1053 = vmatpush1.msra.mxu0 0.0
      %1054 = vmatprep.subr.mxu0 0.0
      %1055 = vmatpush1.msra.mxu0 0.0
      %1056 = vmatprep.subr.mxu0 0.0
      %1057 = vmatpush1.msra.mxu0 0.0
      %1058 = vmatprep.subr.mxu0 0.0
      %1059 = vmatpush1.msra.mxu0 0.0
      %1060 = vmatprep.subr.mxu0 0.0
      %1061 = vmatpush1.msra.mxu0 0.0
      %1062 = vmatprep.subr.mxu0 0.0
      %1063 = vmatpush1.msra.mxu0 0.0
      %1064 = vmatprep.subr.mxu0 0.0
      %1065 = vmatpush1.msra.mxu0 0.0
      %1066 = vmatprep.subr.mxu0 0.0
      %1067 = vmatpush1.msra.mxu0 0.0
      %1068 = vmatprep.subr.mxu0 0.0
      %1069 = vmatpush1.msra.mxu0 0.0
      %1070 = vmatprep.subr.mxu0 0.0
      %1071 = vmatpush1.msra.mxu0 0.0
      %1072 = vmatprep.subr.mxu0 0.0
      %1073 = vmatpush1.msra.mxu0 0.0
      %1074 = vmatprep.subr.mxu0 0.0
      %1075 = vmatpush1.msra.mxu0 0.0
      %1076 = vmatprep.subr.mxu0 0.0
      %1077 = vmatpush1.msra.mxu0 0.0
      %1078 = vmatprep.mubr.f32.mxu0 0.0
      %1079 = vmatmul.mubr.f32.gmra.mrb[0].mxu0 %v1003
      %v1080 = vpop.f32.mrb[0].mxu0
      %v1081 = vadd.f32 %v997, %v1080
      %v1082 = vpop.f32.mrb[0].mxu0
      %1083 = vmatprep.mubr.f32.mxu0 0.0
      %1084 = vmatmul.mubr.f32.gmra.mrb[0].mxu0 %v1006
      %v1085 = vpop.f32.mrb[0].mxu0
      %v1086 = vadd.f32 %v998, %v1085
      %v1087 = vpop.f32.mrb[0].mxu0
      %1088 = vmatprep.mubr.f32.mxu0 0.0
      %1089 = vmatmul.mubr.f32.gmra.mrb[0].mxu0 %v1009
      %v1090 = vpop.f32.mrb[0].mxu0
      %v1091 = vadd.f32 %v999, %v1090
      %v1092 = vpop.f32.mrb[0].mxu0
      %1093 = vmatprep.mubr.f32.mxu0 0.0
      %1094 = vmatmul.mubr.f32.gmra.mrb[0].mxu0 %v1012
      %v1095 = vpop.f32.mrb[0].mxu0
      %v1096 = vadd.f32 %v1000, %v1095
      %v1097 = vpop.f32.mrb[0].mxu0
      %1098 = vdwg.mxu0
      %v1099 = vmax.f32 %v1081, -5.0
      %v1100 = vmax.f32 %v1086, -5.0
      %v1101 = vmax.f32 %v1091, -5.0
      %v1102 = vmax.f32 %v1096, -5.0
      %v1103 = vmin.f32 %v1099, 5.0
      %v1104 = vmin.f32 %v1100, 5.0
      %v1105 = vmin.f32 %v1101, 5.0
      %v1106 = vmin.f32 %v1102, 5.0
      %v1107 = vsub.f32 %v1081, %v1103
      %v1108 = vsub.f32 %v1086, %v1104
      %v1109 = vsub.f32 %v1091, %v1105
      %v1110 = vsub.f32 %v1096, %v1106
      %v1111 = vmul.f32 %v1107, 0.01
      %v1112 = vmul.f32 %v1108, 0.01
      %v1113 = vmul.f32 %v1109, 0.01
      %v1114 = vmul.f32 %v1110, 0.01
      %v1115 = vadd.f32 %v1103, %v1111
      %v1116 = vadd.f32 %v1104, %v1112
      %v1117 = vadd.f32 %v1105, %v1113
      %v1118 = vadd.f32 %v1106, %v1114
      %v1119 = vld [vmem:[%s8] sm:$0xff]
      %v1120 = vld [vmem:[%s8 + $0x8] sm:$0x3]
      %v1121 = vld [vmem:[%s9] sm:$0xff]
      %v1122 = vld [vmem:[%s9 + $0x8] sm:$0x3]
      %vm1123 = vcmask 261120
      %v1125 = vsel %vm1123, %v1119, 0
      %v1128 = vsel %vm1123, %v1120, 0
      %1130 = vmatprep.subr.mxu0 0.0
      %1131 = vmatpush1.msra.mxu0 %v1115
      %1132 = vmatprep.subr.mxu0 0.0
      %1133 = vmatpush1.msra.mxu0 %v1116
      %1134 = vmatprep.subr.mxu0 0.0
      %1135 = vmatpush1.msra.mxu0 %v1117
      %1136 = vmatprep.subr.mxu0 0.0
      %1137 = vmatpush1.msra.mxu0 %v1118
      %1138 = vmatprep.subr.mxu0 0.0
      %1139 = vmatpush1.msra.mxu0 0.0
      %1140 = vmatprep.subr.mxu0 0.0
      %1141 = vmatpush1.msra.mxu0 0.0
      %1142 = vmatprep.subr.mxu0 0.0
      %1143 = vmatpush1.msra.mxu0 0.0
      %1144 = vmatprep.subr.mxu0 0.0
      %1145 = vmatpush1.msra.mxu0 0.0
      %1146 = vmatprep.subr.mxu0 0.0
      %1147 = vmatpush1.msra.mxu0 0.0
      %1148 = vmatprep.subr.mxu0 0.0
      %1149 = vmatpush1.msra.mxu0 0.0
      %1150 = vmatprep.subr.mxu0 0.0
      %1151 = vmatpush1.msra.mxu0 0.0
      %1152 = vmatprep.subr.mxu0 0.0
      %1153 = vmatpush1.msra.mxu0 0.0
      %1154 = vmatprep.subr.mxu0 0.0
      %1155 = vmatpush1.msra.mxu0 0.0
      %1156 = vmatprep.subr.mxu0 0.0
      %1157 = vmatpush1.msra.mxu0 0.0
      %1158 = vmatprep.subr.mxu0 0.0
      %1159 = vmatpush1.msra.mxu0 0.0
      %1160 = vmatprep.subr.mxu0 0.0
      %1161 = vmatpush1.msra.mxu0 0.0
      %1162 = vmatprep.subr.mxu0 0.0
      %1163 = vmatpush1.msra.mxu0 0.0
      %1164 = vmatprep.subr.mxu0 0.0
      %1165 = vmatpush1.msra.mxu0 0.0
      %1166 = vmatprep.subr.mxu0 0.0
      %1167 = vmatpush1.msra.mxu0 0.0
      %1168 = vmatprep.subr.mxu0 0.0
      %1169 = vmatpush1.msra.mxu0 0.0
      %1170 = vmatprep.subr.mxu0 0.0
      %1171 = vmatpush1.msra.mxu0 0.0
      %1172 = vmatprep.subr.mxu0 0.0
      %1173 = vmatpush1.msra.mxu0 0.0
      %1174 = vmatprep.subr.mxu0 0.0
      %1175 = vmatpush1.msra.mxu0 0.0
      %1176 = vmatprep.subr.mxu0 0.0
      %1177 = vmatpush1.msra.mxu0 0.0
      %1178 = vmatprep.subr.mxu0 0.0
      %1179 = vmatpush1.msra.mxu0 0.0
      %1180 = vmatprep.subr.mxu0 0.0
      %1181 = vmatpush1.msra.mxu0 0.0
      %1182 = vmatprep.subr.mxu0 0.0
      %1183 = vmatpush1.msra.mxu0 0.0
      %1184 = vmatprep.subr.mxu0 0.0
      %1185 = vmatpush1.msra.mxu0 0.0
      %1186 = vmatprep.subr.mxu0 0.0
      %1187 = vmatpush1.msra.mxu0 0.0
      %1188 = vmatprep.subr.mxu0 0.0
      %1189 = vmatpush1.msra.mxu0 0.0
      %1190 = vmatprep.subr.mxu0 0.0
      %1191 = vmatpush1.msra.mxu0 0.0
      %1192 = vmatprep.subr.mxu0 0.0
      %1193 = vmatpush1.msra.mxu0 0.0
      %1194 = vmatprep.mubr.f32.mxu0 0.0
      %1195 = vmatmul.mubr.f32.gmra.mrb[0].mxu0 %v1125
      %v1196 = vpop.f32.mrb[0].mxu0
      %v1197 = vadd.f32 %v1121, %v1196
      %v1198 = vpop.f32.mrb[0].mxu0
      %1199 = vmatprep.mubr.f32.mxu0 0.0
      %1200 = vmatmul.mubr.f32.gmra.mrb[0].mxu0 %v1128
      %v1201 = vpop.f32.mrb[0].mxu0
      %v1202 = vadd.f32 %v1122, %v1201
      %v1203 = vpop.f32.mrb[0].mxu0
      %1204 = vdwg.mxu0
      %1205 = vst.msk [vmem:[%s361] sm:$0xff] %vm988, %v1197
      %vm1206 = vcmask 1024
      %1207 = vst.msk [vmem:[%s361 + $0x8] sm:$0x3] %vm1206, %v1202
      %p1208 = scmp.lt.s32.totalorder %s21, 1
      %s1209 = scalar_select %p1208, %s21, 1
      %s1210 = smul.addr %s1209, 2
      %s1211 = smul.addr %s1210, 8
      %s1212 = scalar_lea.vmem %s10, %s1211
      // Predicated region
      $region61: #{conv_dense_abba_forward.1} parent=59 // pred_check
        %p1213 = pneg %p254
      $region62: #{conv_dense_abba_forward.1} parent=59 // pred_check_branch
        %1215 = sbr.rel (%p1213) target = $region64
      $region63: #{conv_dense_abba_forward.1} parent=59 // pred_region
        _
      $region64: #{conv_dense_abba_forward.1} parent=59 // pred_fallthru
        _
    $region60: #{conv_dense_abba_forward.1} parent=5 // pred_fallthru
      _
    %p1216 = scmp.le.s32.totalorder 2, %s16
    // Predicated region
    $region65: #{conv_dense_abba_forward.1} parent=5 // pred_check
      %p1217 = pneg %p1216
    $region66: #{conv_dense_abba_forward.1} parent=5 // pred_check_branch
      %1219 = sbr.rel (%p1217) target = $region68
    $region67: #{conv_dense_abba_forward.1} parent=5 // pred_region
      %s1220 = ssub.s32 %s16, 2
      // Predicated region
      $region69: #{conv_dense_abba_forward.1} parent=67 // pred_check
        %p1221 = pneg %p260
      $region70: #{conv_dense_abba_forward.1} parent=67 // pred_check_branch
        %1223 = sbr.rel (%p1221) target = $region72
      $region71: #{conv_dense_abba_forward.1} parent=67 // pred_region
        %p1224 = scmp.lt.s32.totalorder %s22, 1
        %s1225 = scalar_select %p1224, %s22, 1
        %s1226 = smul.addr %s1225, 2
        %s1227 = smul.addr %s1226, 8
        %s1228 = scalar_lea.vmem %s10, %s1227
      $region72: #{conv_dense_abba_forward.1} parent=67 // pred_fallthru
        _
    $region68: #{conv_dense_abba_forward.1} parent=5 // pred_fallthru
      _
  $region6: #{conv_dense_abba_forward.1} parent=0 // loop_footer
    %s20 = sadd.s32 1, %s16
  $region7: #{conv_dense_abba_forward.1} parent=0 // loop_footer_branch
    %15 = sbr.rel target = $region3
  $region8: #{conv_dense_abba_forward.1} parent=0 // loop_exit
    _

</llo_original>
